<compile_context>
chip_gen: v7x
topology: tpu7x:2x2x1
jax: 0.10.0
libtpu: 0.0.40
codegen_flags: <defaults>
</compile_context>

<pallas_src>
import functools

import jax
import jax.numpy as jnp
from jax.experimental import pallas as pl
from jax.experimental.pallas import tpu as pltpu


_VMEM = pl.BlockSpec(memory_space=pltpu.MemorySpace.VMEM)
_SMEM = pl.BlockSpec(memory_space=pltpu.MemorySpace.SMEM)
_ANY = pl.BlockSpec(memory_space=pl.ANY)


def _moco_fused_kernel(qptr_ref, imq_ref, imk_ref,
                       w1q_ref, b1q_ref, w2q_ref, b2q_ref,
                       w1k_ref, b1k_ref, w2k_ref, b2k_ref,
                       queue_hbm,
                       loss_ref, w1k_out, b1k_out, w2k_out, b2k_out, queue_out,
                       qbuf, qsem, keys_buf, enq_sem, m_sc, s_sc,
                       *, m, inv_t, batch, symmetric, tile_k, num_chunks):
    """EMA update + encode(q,k) + symmetric contrastive loss + queue enqueue."""
    f32 = jnp.float32
    bf16 = jnp.bfloat16

    # Read the scalar queue pointer early (before any DMA waits).
    ptr = qptr_ref[0]

    # ---- start streaming the first queue chunk: overlaps the encoder work ----
    def fetch(s, slot):
        off = s * tile_k
        if not isinstance(off, int):
            off = pl.multiple_of(off, tile_k)
        pltpu.make_async_copy(queue_hbm.at[pl.ds(off, tile_k), :],
                              qbuf.at[slot], qsem.at[slot]).start()

    fetch(0, 0)

    # ---- _momentum_update_key_encoder: param_k = m*param_k + (1-m)*param_q ----
    one_m = 1.0 - m
    w1k = w1k_ref[...] * m + w1q_ref[...] * one_m
    b1k = b1k_ref[...] * m + b1q_ref[...] * one_m
    w2k = w2k_ref[...] * m + w2q_ref[...] * one_m
    b2k = b2k_ref[...] * m + b2q_ref[...] * one_m
    w1k_out[...] = w1k
    b1k_out[...] = b1k
    w2k_out[...] = w2k
    b2k_out[...] = b2k

    # ---- encoders over the stacked batch x = [im_q; im_k]  -> (2N, D_in) ----
    # (concat in f32 so the sublane offset is tile-aligned, then cast to bf16)
    xb = jnp.concatenate([imq_ref[...].astype(f32), imk_ref[...].astype(f32)],
                         axis=0).astype(bf16)
    in_dim = w1q_ref.shape[1]

    # Fused layer-1: both encoders share the same LHS -> one wide bf16 matmul.
    w1_cat = jnp.concatenate([w1q_ref[...], w1k], axis=1).astype(bf16)
    h_all = jnp.dot(xb, w1_cat, preferred_element_type=f32)      # (2N, 2*in_dim)
    hq = jnp.maximum(h_all[:, :in_dim] + b1q_ref[...], 0.0)
    hk = jnp.maximum(h_all[:, in_dim:] + b1k, 0.0)

    def head(h, w2, b2):
        f = jnp.dot(h.astype(bf16), w2.astype(bf16),
                    preferred_element_type=f32) + b2              # (2N, fea)
        # F.normalize(dim=1): x / max(||x||, 1e-12) == x * rsqrt(max(||x||^2, 1e-24))
        inv_norm = jax.lax.rsqrt(
            jnp.maximum(jnp.sum(f * f, axis=1, keepdims=True), 1e-24))
        return f * inv_norm

    q_all = head(hq, w2q_ref[...], b2q_ref[...])
    # TODO(synk): key branch runs under torch.no_grad(); forward-only here, so
    # no stop_gradient / custom VJP is provided.
    k_all = head(hk, w2k, b2k)

    if symmetric:
        # rows 0..N-1: (q(im_q), k(im_k)) ; rows N..2N-1: (q(im_k), k(im_q))
        q_use = q_all
        k_pair = pltpu.roll(k_all, shift=batch, axis=0)   # XLU sublane rotate
        keys = k_all                      # enqueue order == torch.cat([k1, k2], 0)
    else:
        q_use = q_all[:batch, :]
        k_pair = k_all[batch:, :]
        keys = k_pair

    # ---- contrastive loss: cross_entropy([l_pos, l_neg] / T, label=0) -------
    qs = q_use * inv_t                                    # fold 1/T into q once
    qs_bf = qs.astype(bf16)
    l_pos = jnp.sum(qs * k_pair, axis=1, keepdims=True)   # (R, 1) f32

    # Online logsumexp over streamed queue chunks; seeded with the positive
    # logit so no -inf is needed.
    m_sc[...] = l_pos
    s_sc[...] = jnp.ones_like(s_sc)

    @pl.loop(0, num_chunks)
    def _(s):
        slot = s & 1
        pltpu.make_async_copy(queue_hbm.at[pl.ds(0, tile_k), :],
                              qbuf.at[slot], qsem.at[slot]).wait()

        @pl.when(s + 1 < num_chunks)
        def _():
            fetch(s + 1, 1 - slot)

        # (R, fea) . (tile_k, fea)^T -> (R, tile_k), f32 accumulation.
        # TODO(synk): verify with pl.lower_as_mlir that this transposed-RHS
        # contraction does not emit per-tile vxpose; row-major queue layout is
        # kept for the lane-dense enqueue.
        ln = jax.lax.dot_general(qs_bf, qbuf[slot],
                                 dimension_numbers=(((1,), (1,)), ((), ())),
                                 preferred_element_type=f32)
        m_new = jnp.maximum(m_sc[...], jnp.max(ln, axis=1, keepdims=True))
        s_sc[...] = (s_sc[...] * jnp.exp(m_sc[...] - m_new)
                     + jnp.sum(jnp.exp(ln - m_new), axis=1, keepdims=True))
        m_sc[...] = m_new

    lse = m_sc[...] + jnp.log(s_sc[...])                          # (R, 1)
    # symmetric: loss_12 + loss_21 == sum over 2N rows / N ; else mean over N
    loss = jnp.sum(lse - l_pos) * (1.0 / batch)
    loss_ref[...] = jnp.full((1, 1), loss, dtype=f32)

    # ---- _dequeue_and_enqueue: DMA only the new rows into the HBM queue -----
    n_keys = keys.shape[0]
    keys_buf[...] = keys.astype(bf16)
    if n_keys % 8 == 0:
        ptr = pl.multiple_of(ptr, 8)      # ptr advances in n_keys steps
    enq = pltpu.make_async_copy(keys_buf,
                                queue_out.at[pl.ds(ptr, n_keys), :], enq_sem)
    enq.start()
    enq.wait()


def moco_forward(params_q, params_k, queue, queue_ptr, im_q, im_k,
                 *, m=0.999, T=0.07, symmetric=True, tile_k=None):
    """Functional MoCoWrapper.forward.

    Returns (loss, new_params_k, new_queue, new_queue_ptr).
    The queue is stored row-major as (K, fea_dim) in bfloat16 (== PyTorch
    buffer transposed); only the newly enqueued rows are written each step.
    """
    n = im_q.shape[0]
    K, fea = queue.shape
    bs = 2 * n if symmetric else n
    assert K % bs == 0, "queue size must be divisible by the enqueued batch"

    if tile_k is None:
        tile_k = K
        for cand in (2048, 1024, 512, 256, 128, 64, 32, 16, 8):
            if cand <= K and K % cand == 0:
                tile_k = cand
                break
    assert K % tile_k == 0, "tile_k must divide K"
    num_chunks = K // tile_k

    d_in = 1
    for s in im_q.shape[1:]:
        d_in *= int(s)
    in_dim = params_q["w1"].shape[1]
    rows = bs

    imq2 = im_q.reshape(n, d_in).astype(jnp.bfloat16)
    imk2 = im_k.reshape(n, d_in).astype(jnp.bfloat16)
    queue_bf = queue if queue.dtype == jnp.bfloat16 else queue.astype(jnp.bfloat16)

    kern = functools.partial(_moco_fused_kernel, m=m, inv_t=1.0 / T, batch=n,
                             symmetric=symmetric, tile_k=tile_k,
                             num_chunks=num_chunks)

    out_shape = (
        jax.ShapeDtypeStruct((1, 1), jnp.float32),                 # loss
        jax.ShapeDtypeStruct(params_k["w1"].shape, jnp.float32),   # updated key params
        jax.ShapeDtypeStruct(params_k["b1"].shape, jnp.float32),
        jax.ShapeDtypeStruct(params_k["w2"].shape, jnp.float32),
        jax.ShapeDtypeStruct(params_k["b2"].shape, jnp.float32),
        jax.ShapeDtypeStruct((K, fea), jnp.bfloat16),              # updated queue
    )

    param_elems = d_in * in_dim + in_dim + in_dim * fea + fea
    flops = (2 * (2 * n) * d_in * (2 * in_dim)      # fused layer-1
             + 2 * 2 * (2 * n) * in_dim * fea       # two projection heads
             + 2 * rows * fea * K                   # l_neg
             + 2 * rows * fea)                      # l_pos
    transcendentals = rows * (K + 2) + 4 * n
    bytes_accessed = (K * fea * 2                   # streamed queue read (bf16)
                      + rows * fea * 2              # enqueue write
                      + 2 * n * d_in * 2            # images (bf16)
                      + 8 * param_elems * 4)        # params read + key write

    outs = pl.pallas_call(
        kern,
        out_shape=out_shape,
        in_specs=[_SMEM, _VMEM, _VMEM,
                  _VMEM, _VMEM, _VMEM, _VMEM,
                  _VMEM, _VMEM, _VMEM, _VMEM,
                  _ANY],
        out_specs=(_VMEM, _VMEM, _VMEM, _VMEM, _VMEM, _ANY),
        scratch_shapes=[
            pltpu.VMEM((2, tile_k, fea), jnp.bfloat16),    # queue double buffer
            pltpu.SemaphoreType.DMA((2,)),
            pltpu.VMEM((rows, fea), jnp.bfloat16),         # enqueue staging
            pltpu.SemaphoreType.DMA(()),
            pltpu.VMEM((rows, 1), jnp.float32),            # running row max
            pltpu.VMEM((rows, 1), jnp.float32),            # running row sumexp
        ],
        # in-place updates: params_k (inputs 7..10) and queue (input 11)
        input_output_aliases={7: 1, 8: 2, 9: 3, 10: 4, 11: 5},
        compiler_params=pltpu.CompilerParams(vmem_limit_bytes=32 * 1024 * 1024),
        cost_estimate=pl.CostEstimate(flops=flops,
                                      transcendentals=transcendentals,
                                      bytes_accessed=bytes_accessed),
    )(queue_ptr.astype(jnp.int32), imq2, imk2,
      params_q["w1"], params_q["b1"], params_q["w2"], params_q["b2"],
      params_k["w1"], params_k["b1"], params_k["w2"], params_k["b2"],
      queue_bf)

    loss, w1k, b1k, w2k, b2k, new_queue = outs
    new_params_k = {"w1": w1k, "b1": b1k, "w2": w2k, "b2": b2k}
    new_ptr = (queue_ptr + bs) % K
    # TODO(synk): concat_all_gather / _batch_shuffle_ddp / _batch_unshuffle_ddp
    # are torch.distributed ops; on a single device (and no BatchNorm in this
    # encoder) shuffle . unshuffle is the identity, so they are no-ops here.
    return loss[0, 0], new_params_k, new_queue, new_ptr


if __name__ == "__main__":
    # Small shapes consistent with the module: images (N, C, H, W)
    N, C, H, W = 8, 4, 8, 8
    D_in = C * H * W        # 256 (flattened image -> backbone in features)
    in_dim = 256            # encoder output / head input dim
    fea_dim = 128           # MoCo feature dim
    K = 512                 # queue size (K % (2*N) == 0, as asserted in PyTorch)
    m_momentum = 0.999
    T = 0.07

    key = jax.random.PRNGKey(0)
    ks = jax.random.split(key, 7)

    params_q = {
        "w1": jax.random.normal(ks[0], (D_in, in_dim), jnp.float32) * 0.05,
        "b1": jax.random.normal(ks[1], (1, in_dim), jnp.float32) * 0.01,
        "w2": jax.random.normal(ks[2], (in_dim, fea_dim), jnp.float32) * 0.05,
        "b2": jax.random.normal(ks[3], (1, fea_dim), jnp.float32) * 0.01,
    }
    # param_k.data.copy_(param_q.data)
    params_k = jax.tree.map(jnp.copy, params_q)

    # register_buffer('queue', randn(fea_dim, K)); normalize(dim=0);
    # stored transposed (K, fea_dim) and in bf16 for lane-dense row enqueue.
    queue_fc = jax.random.normal(ks[4], (fea_dim, K), jnp.float32)
    queue_fc = queue_fc / jnp.maximum(
        jnp.sqrt(jnp.sum(queue_fc * queue_fc, axis=0, keepdims=True)), 1e-12)
    queue = queue_fc.T.astype(jnp.bfloat16)
    queue_ptr = jnp.zeros((1,), jnp.int32)

    im_q = jax.random.normal(ks[5], (N, C, H, W), jnp.float32)
    im_k = jax.random.normal(ks[6], (N, C, H, W), jnp.float32)

    fwd = jax.jit(functools.partial(
        moco_forward, m=m_momentum, T=T, symmetric=True, tile_k=256))
    loss, params_k, queue, queue_ptr = fwd(
        params_q, params_k, queue, queue_ptr, im_q, im_k)

    jax.block_until_ready((loss, params_k, queue, queue_ptr))
    assert loss.shape == () and bool(jnp.isfinite(loss))
    print("KERNEL_OK")
</pallas_src>

<mosaic_0001>
module attributes {stable_mosaic.version = 11 : i64} {
  func.func @_moco_fused_kernel(%arg0: memref<1xi32, #tpu.memory_space<smem>>, %arg1: memref<8x256xbf16, #tpu.memory_space<vmem>>, %arg2: memref<8x256xbf16, #tpu.memory_space<vmem>>, %arg3: memref<256x256xf32, #tpu.memory_space<vmem>>, %arg4: memref<1x256xf32, #tpu.memory_space<vmem>>, %arg5: memref<256x128xf32, #tpu.memory_space<vmem>>, %arg6: memref<1x128xf32, #tpu.memory_space<vmem>>, %arg7: memref<256x256xf32, #tpu.memory_space<vmem>>, %arg8: memref<1x256xf32, #tpu.memory_space<vmem>>, %arg9: memref<256x128xf32, #tpu.memory_space<vmem>>, %arg10: memref<1x128xf32, #tpu.memory_space<vmem>>, %arg11: memref<512x128xbf16, #tpu.memory_space<any>>, %arg12: memref<1x1xf32, #tpu.memory_space<vmem>>, %arg13: memref<256x256xf32, #tpu.memory_space<vmem>>, %arg14: memref<1x256xf32, #tpu.memory_space<vmem>>, %arg15: memref<256x128xf32, #tpu.memory_space<vmem>>, %arg16: memref<1x128xf32, #tpu.memory_space<vmem>>, %arg17: memref<512x128xbf16, #tpu.memory_space<any>>, %arg18: memref<2x256x128xbf16, #tpu.memory_space<vmem>>, %arg19: memref<2x!tpu.dma_semaphore, #tpu.memory_space<semaphore_mem>>, %arg20: memref<16x128xbf16, #tpu.memory_space<vmem>>, %arg21: memref<!tpu.dma_semaphore, #tpu.memory_space<semaphore_mem>>, %arg22: memref<16x1xf32, #tpu.memory_space<vmem>>, %arg23: memref<16x1xf32, #tpu.memory_space<vmem>>) attributes {dimension_semantics = [], scalar_prefetch = 0 : i64, scratch_operands = 6 : i64, tpu.core_type = #tpu.core_type<tc>} {
    %c0 = arith.constant 0 : index
    %0 = memref.load %arg0[%c0] : memref<1xi32, #tpu.memory_space<smem>>
    %c0_i32 = arith.constant 0 : i32
    %c0_i32_0 = arith.constant 0 : i32
    %c0_i32_1 = arith.constant 0 : i32
    %c0_i32_2 = arith.constant 0 : i32
    %1 = tpu.memref_slice %arg11[%c0_i32_1, %c0_i32_2] : memref<512x128xbf16, #tpu.memory_space<any>> -> memref<256x128xbf16, #tpu.memory_space<any>>
    %c0_i32_3 = arith.constant 0 : i32
    %c0_i32_4 = arith.constant 0 : i32
    %2 = tpu.memref_slice %arg18[%c0_i32, %c0_i32_3, %c0_i32_4] : memref<2x256x128xbf16, #tpu.memory_space<vmem>> -> memref<1x256x128xbf16, #tpu.memory_space<vmem>>
    %3 = tpu.memref_squeeze %2 : memref<1x256x128xbf16, #tpu.memory_space<vmem>> -> memref<256x128xbf16, #tpu.memory_space<vmem>>
    %4 = tpu.memref_slice %arg19[%c0_i32_0] : memref<2x!tpu.dma_semaphore, #tpu.memory_space<semaphore_mem>> -> memref<1x!tpu.dma_semaphore, #tpu.memory_space<semaphore_mem>>
    %5 = tpu.memref_squeeze %4 : memref<1x!tpu.dma_semaphore, #tpu.memory_space<semaphore_mem>> -> memref<!tpu.dma_semaphore, #tpu.memory_space<semaphore_mem>>
    tpu.enqueue_dma source(%1 : memref<256x128xbf16, #tpu.memory_space<any>>) target(%3 : memref<256x128xbf16, #tpu.memory_space<vmem>>) target_semaphore(%5 : memref<!tpu.dma_semaphore, #tpu.memory_space<semaphore_mem>>)
    %c0_5 = arith.constant 0 : index
    %c0_6 = arith.constant 0 : index
    %6 = vector.load %arg7[%c0_5, %c0_6] : memref<256x256xf32, #tpu.memory_space<vmem>>, vector<256x256xf32>
    %cst = arith.constant 9.990000e-01 : f32
    %7 = vector.broadcast %cst : f32 to vector<256x256xf32>
    %8 = arith.mulf %6, %7 : vector<256x256xf32>
    %c0_7 = arith.constant 0 : index
    %c0_8 = arith.constant 0 : index
    %9 = vector.load %arg3[%c0_7, %c0_8] : memref<256x256xf32, #tpu.memory_space<vmem>>, vector<256x256xf32>
    %cst_9 = arith.constant 1.000000e-03 : f32
    %10 = vector.broadcast %cst_9 : f32 to vector<256x256xf32>
    %11 = arith.mulf %9, %10 : vector<256x256xf32>
    %12 = arith.addf %8, %11 : vector<256x256xf32>
    %c0_10 = arith.constant 0 : index
    %c0_11 = arith.constant 0 : index
    %13 = vector.load %arg8[%c0_10, %c0_11] : memref<1x256xf32, #tpu.memory_space<vmem>>, vector<1x256xf32>
    %cst_12 = arith.constant 9.990000e-01 : f32
    %14 = vector.broadcast %cst_12 : f32 to vector<1x256xf32>
    %15 = arith.mulf %13, %14 : vector<1x256xf32>
    %c0_13 = arith.constant 0 : index
    %c0_14 = arith.constant 0 : index
    %16 = vector.load %arg4[%c0_13, %c0_14] : memref<1x256xf32, #tpu.memory_space<vmem>>, vector<1x256xf32>
    %cst_15 = arith.constant 1.000000e-03 : f32
    %17 = vector.broadcast %cst_15 : f32 to vector<1x256xf32>
    %18 = arith.mulf %16, %17 : vector<1x256xf32>
    %19 = arith.addf %15, %18 : vector<1x256xf32>
    %c0_16 = arith.constant 0 : index
    %c0_17 = arith.constant 0 : index
    %20 = vector.load %arg9[%c0_16, %c0_17] : memref<256x128xf32, #tpu.memory_space<vmem>>, vector<256x128xf32>
    %cst_18 = arith.constant 9.990000e-01 : f32
    %21 = vector.broadcast %cst_18 : f32 to vector<256x128xf32>
    %22 = arith.mulf %20, %21 : vector<256x128xf32>
    %c0_19 = arith.constant 0 : index
    %c0_20 = arith.constant 0 : index
    %23 = vector.load %arg5[%c0_19, %c0_20] : memref<256x128xf32, #tpu.memory_space<vmem>>, vector<256x128xf32>
    %cst_21 = arith.constant 1.000000e-03 : f32
    %24 = vector.broadcast %cst_21 : f32 to vector<256x128xf32>
    %25 = arith.mulf %23, %24 : vector<256x128xf32>
    %26 = arith.addf %22, %25 : vector<256x128xf32>
    %c0_22 = arith.constant 0 : index
    %c0_23 = arith.constant 0 : index
    %27 = vector.load %arg10[%c0_22, %c0_23] : memref<1x128xf32, #tpu.memory_space<vmem>>, vector<1x128xf32>
    %cst_24 = arith.constant 9.990000e-01 : f32
    %28 = vector.broadcast %cst_24 : f32 to vector<1x128xf32>
    %29 = arith.mulf %27, %28 : vector<1x128xf32>
    %c0_25 = arith.constant 0 : index
    %c0_26 = arith.constant 0 : index
    %30 = vector.load %arg6[%c0_25, %c0_26] : memref<1x128xf32, #tpu.memory_space<vmem>>, vector<1x128xf32>
    %cst_27 = arith.constant 1.000000e-03 : f32
    %31 = vector.broadcast %cst_27 : f32 to vector<1x128xf32>
    %32 = arith.mulf %30, %31 : vector<1x128xf32>
    %33 = arith.addf %29, %32 : vector<1x128xf32>
    %c0_28 = arith.constant 0 : index
    %c0_29 = arith.constant 0 : index
    %34 = vector.load %arg13[%c0_28, %c0_29] : memref<256x256xf32, #tpu.memory_space<vmem>>, vector<256x256xf32>
    tpu.vector_store %arg13[%c0_28, %c0_29], %12 {strides = array<i32>} : memref<256x256xf32, #tpu.memory_space<vmem>>, vector<256x256xf32>,
    %c0_30 = arith.constant 0 : index
    %c0_31 = arith.constant 0 : index
    %35 = vector.load %arg14[%c0_30, %c0_31] : memref<1x256xf32, #tpu.memory_space<vmem>>, vector<1x256xf32>
    tpu.vector_store %arg14[%c0_30, %c0_31], %19 {strides = array<i32>} : memref<1x256xf32, #tpu.memory_space<vmem>>, vector<1x256xf32>,
    %c0_32 = arith.constant 0 : index
    %c0_33 = arith.constant 0 : index
    %36 = vector.load %arg15[%c0_32, %c0_33] : memref<256x128xf32, #tpu.memory_space<vmem>>, vector<256x128xf32>
    tpu.vector_store %arg15[%c0_32, %c0_33], %26 {strides = array<i32>} : memref<256x128xf32, #tpu.memory_space<vmem>>, vector<256x128xf32>,
    %c0_34 = arith.constant 0 : index
    %c0_35 = arith.constant 0 : index
    %37 = vector.load %arg16[%c0_34, %c0_35] : memref<1x128xf32, #tpu.memory_space<vmem>>, vector<1x128xf32>
    tpu.vector_store %arg16[%c0_34, %c0_35], %33 {strides = array<i32>} : memref<1x128xf32, #tpu.memory_space<vmem>>, vector<1x128xf32>,
    %c0_36 = arith.constant 0 : index
    %c0_37 = arith.constant 0 : index
    %38 = vector.load %arg1[%c0_36, %c0_37] : memref<8x256xbf16, #tpu.memory_space<vmem>>, vector<8x256xbf16>
    %39 = arith.extf %38 : vector<8x256xbf16> to vector<8x256xf32>
    %c0_38 = arith.constant 0 : index
    %c0_39 = arith.constant 0 : index
    %40 = vector.load %arg2[%c0_38, %c0_39] : memref<8x256xbf16, #tpu.memory_space<vmem>>, vector<8x256xbf16>
    %41 = arith.extf %40 : vector<8x256xbf16> to vector<8x256xf32>
    %42 = tpu.concatenate %39, %41 in 0 : vector<8x256xf32>, vector<8x256xf32> -> vector<16x256xf32>
    %43 = arith.truncf %42 : vector<16x256xf32> to vector<16x256xbf16>
    %c0_40 = arith.constant 0 : index
    %c0_41 = arith.constant 0 : index
    %44 = vector.load %arg3[%c0_40, %c0_41] : memref<256x256xf32, #tpu.memory_space<vmem>>, vector<256x256xf32>
    %45 = tpu.concatenate %44, %12 in 1 : vector<256x256xf32>, vector<256x256xf32> -> vector<256x512xf32>
    %46 = arith.truncf %45 : vector<256x512xf32> to vector<256x512xbf16>
    %cst_42 = arith.constant dense<0.000000e+00> : vector<16x512xf32>
    %47 = tpu.matmul %43, %46, %cst_42 {dimension_numbers = #tpu.dot_dimension_numbers<[1], [0], [0], [1], [0, 0, 1, 1], [], []>} : vector<16x256xbf16>, vector<256x512xbf16>, vector<16x512xf32> -> vector<16x512xf32>
    %48 = vector.extract_strided_slice %47 {offsets = [0, 0], sizes = [16, 256], strides = [1, 1]} : vector<16x512xf32> to vector<16x256xf32>
    %c0_43 = arith.constant 0 : index
    %c0_44 = arith.constant 0 : index
    %49 = vector.load %arg4[%c0_43, %c0_44] : memref<1x256xf32, #tpu.memory_space<vmem>>, vector<1x256xf32>
    %50 = vector.broadcast %49 : vector<1x256xf32> to vector<16x256xf32>
    %51 = arith.addf %48, %50 : vector<16x256xf32>
    %cst_45 = arith.constant 0.000000e+00 : f32
    %52 = vector.broadcast %cst_45 : f32 to vector<16x256xf32>
    %53 = arith.maximumf %51, %52 : vector<16x256xf32>
    %54 = vector.extract_strided_slice %47 {offsets = [0, 256], sizes = [16, 256], strides = [1, 1]} : vector<16x512xf32> to vector<16x256xf32>
    %55 = vector.broadcast %19 : vector<1x256xf32> to vector<16x256xf32>
    %56 = arith.addf %54, %55 : vector<16x256xf32>
    %cst_46 = arith.constant 0.000000e+00 : f32
    %57 = vector.broadcast %cst_46 : f32 to vector<16x256xf32>
    %58 = arith.maximumf %56, %57 : vector<16x256xf32>
    %c0_47 = arith.constant 0 : index
    %c0_48 = arith.constant 0 : index
    %59 = vector.load %arg5[%c0_47, %c0_48] : memref<256x128xf32, #tpu.memory_space<vmem>>, vector<256x128xf32>
    %c0_49 = arith.constant 0 : index
    %c0_50 = arith.constant 0 : index
    %60 = vector.load %arg6[%c0_49, %c0_50] : memref<1x128xf32, #tpu.memory_space<vmem>>, vector<1x128xf32>
    %61 = arith.truncf %53 : vector<16x256xf32> to vector<16x256xbf16>
    %62 = arith.truncf %59 : vector<256x128xf32> to vector<256x128xbf16>
    %cst_51 = arith.constant dense<0.000000e+00> : vector<16x128xf32>
    %63 = tpu.matmul %61, %62, %cst_51 {dimension_numbers = #tpu.dot_dimension_numbers<[1], [0], [0], [1], [0, 0, 1, 1], [], []>} : vector<16x256xbf16>, vector<256x128xbf16>, vector<16x128xf32> -> vector<16x128xf32>
    %64 = vector.broadcast %60 : vector<1x128xf32> to vector<16x128xf32>
    %65 = arith.addf %63, %64 : vector<16x128xf32>
    %66 = arith.mulf %65, %65 : vector<16x128xf32>
    %cst_52 = arith.constant dense<0.000000e+00> : vector<16xf32>
    %67 = vector.multi_reduction <add>, %66, %cst_52 [1] : vector<16x128xf32> to vector<16xf32>
    %68 = vector.shape_cast %67 : vector<16xf32> to vector<16x1xf32>
    %cst_53 = arith.constant 1.000000e-24 : f32
    %69 = vector.broadcast %cst_53 : f32 to vector<16x1xf32>
    %70 = arith.maximumf %68, %69 : vector<16x1xf32>
    %71 = math.rsqrt %70 : vector<16x1xf32>
    %72 = vector.broadcast %71 : vector<16x1xf32> to vector<16x128xf32>
    %73 = arith.mulf %65, %72 : vector<16x128xf32>
    %74 = arith.truncf %58 : vector<16x256xf32> to vector<16x256xbf16>
    %75 = arith.truncf %26 : vector<256x128xf32> to vector<256x128xbf16>
    %cst_54 = arith.constant dense<0.000000e+00> : vector<16x128xf32>
    %76 = tpu.matmul %74, %75, %cst_54 {dimension_numbers = #tpu.dot_dimension_numbers<[1], [0], [0], [1], [0, 0, 1, 1], [], []>} : vector<16x256xbf16>, vector<256x128xbf16>, vector<16x128xf32> -> vector<16x128xf32>
    %77 = vector.broadcast %33 : vector<1x128xf32> to vector<16x128xf32>
    %78 = arith.addf %76, %77 : vector<16x128xf32>
    %79 = arith.mulf %78, %78 : vector<16x128xf32>
    %cst_55 = arith.constant dense<0.000000e+00> : vector<16xf32>
    %80 = vector.multi_reduction <add>, %79, %cst_55 [1] : vector<16x128xf32> to vector<16xf32>
    %81 = vector.shape_cast %80 : vector<16xf32> to vector<16x1xf32>
    %cst_56 = arith.constant 1.000000e-24 : f32
    %82 = vector.broadcast %cst_56 : f32 to vector<16x1xf32>
    %83 = arith.maximumf %81, %82 : vector<16x1xf32>
    %84 = math.rsqrt %83 : vector<16x1xf32>
    %85 = vector.broadcast %84 : vector<16x1xf32> to vector<16x128xf32>
    %86 = arith.mulf %78, %85 : vector<16x128xf32>
    %c8_i32 = arith.constant 8 : i32
    %87 = tpu.dynamic_rotate %86 by %c8_i32 dim 0 : vector<16x128xf32>, i32 -> vector<16x128xf32>
    %cst_57 = arith.constant 14.2857141 : f32
    %88 = vector.broadcast %cst_57 : f32 to vector<16x128xf32>
    %89 = arith.mulf %73, %88 : vector<16x128xf32>
    %90 = arith.truncf %89 : vector<16x128xf32> to vector<16x128xbf16>
    %91 = arith.mulf %89, %87 : vector<16x128xf32>
    %cst_58 = arith.constant dense<0.000000e+00> : vector<16xf32>
    %92 = vector.multi_reduction <add>, %91, %cst_58 [1] : vector<16x128xf32> to vector<16xf32>
    %93 = vector.shape_cast %92 : vector<16xf32> to vector<16x1xf32>
    %c0_59 = arith.constant 0 : index
    %c0_60 = arith.constant 0 : index
    %94 = vector.load %arg22[%c0_59, %c0_60] : memref<16x1xf32, #tpu.memory_space<vmem>>, vector<16x1xf32>
    tpu.vector_store %arg22[%c0_59, %c0_60], %93 {strides = array<i32>} : memref<16x1xf32, #tpu.memory_space<vmem>>, vector<16x1xf32>,
    %cst_61 = arith.constant 1.000000e+00 : f32
    %95 = vector.broadcast %cst_61 : f32 to vector<16x1xf32>
    %c0_62 = arith.constant 0 : index
    %c0_63 = arith.constant 0 : index
    %96 = vector.load %arg23[%c0_62, %c0_63] : memref<16x1xf32, #tpu.memory_space<vmem>>, vector<16x1xf32>
    tpu.vector_store %arg23[%c0_62, %c0_63], %95 {strides = array<i32>} : memref<16x1xf32, #tpu.memory_space<vmem>>, vector<16x1xf32>,
    %c0_i32_64 = arith.constant 0 : i32
    %c2_i32 = arith.constant 2 : i32
    %97 = arith.addi %c0_i32_64, %c2_i32 : i32
    %c1_i32 = arith.constant 1 : i32
    scf.for %arg24 = %c0_i32_64 to %97 step %c1_i32  : i32 {
      %c1_i32_78 = arith.constant 1 : i32
      %115 = arith.muli %arg24, %c1_i32_78 : i32
      %c0_i32_79 = arith.constant 0 : i32
      %116 = arith.addi %c0_i32_79, %115 : i32
      %c1_i32_80 = arith.constant 1 : i32
      %117 = arith.andi %116, %c1_i32_80 : i32
      %c0_i32_81 = arith.constant 0 : i32
      %c0_i32_82 = arith.constant 0 : i32
      %118 = tpu.memref_slice %arg11[%c0_i32_81, %c0_i32_82] : memref<512x128xbf16, #tpu.memory_space<any>> -> memref<256x128xbf16, #tpu.memory_space<any>>
      %c0_i32_83 = arith.constant 0 : i32
      %c0_i32_84 = arith.constant 0 : i32
      %119 = tpu.memref_slice %arg18[%117, %c0_i32_83, %c0_i32_84] : memref<2x256x128xbf16, #tpu.memory_space<vmem>> -> memref<1x256x128xbf16, #tpu.memory_space<vmem>>
      %120 = tpu.memref_squeeze %119 : memref<1x256x128xbf16, #tpu.memory_space<vmem>> -> memref<256x128xbf16, #tpu.memory_space<vmem>>
      %121 = tpu.memref_slice %arg19[%117] : memref<2x!tpu.dma_semaphore, #tpu.memory_space<semaphore_mem>> -> memref<1x!tpu.dma_semaphore, #tpu.memory_space<semaphore_mem>>
      %122 = tpu.memref_squeeze %121 : memref<1x!tpu.dma_semaphore, #tpu.memory_space<semaphore_mem>> -> memref<!tpu.dma_semaphore, #tpu.memory_space<semaphore_mem>>
      tpu.wait_dma2 semaphore(%122 : memref<!tpu.dma_semaphore, #tpu.memory_space<semaphore_mem>>) src(%118 : memref<256x128xbf16, #tpu.memory_space<any>>) dst(%120 : memref<256x128xbf16, #tpu.memory_space<vmem>>)
      %c1_i32_85 = arith.constant 1 : i32
      %123 = arith.addi %116, %c1_i32_85 : i32
      %c2_i32_86 = arith.constant 2 : i32
      %124 = arith.cmpi slt, %123, %c2_i32_86 : i32
      %125 = arith.extui %124 : i1 to i32
      %c0_i32_87 = arith.constant 0 : i32
      %126 = arith.cmpi ne, %125, %c0_i32_87 : i32
      scf.if %126 {
        %c1_i32_103 = arith.constant 1 : i32
        %148 = arith.addi %116, %c1_i32_103 : i32
        %c1_i32_104 = arith.constant 1 : i32
        %149 = arith.subi %c1_i32_104, %117 : i32
        %c256_i32 = arith.constant 256 : i32
        %150 = arith.muli %148, %c256_i32 : i32
        %151 = tpu.assume_multiple %150, 256 : i32
        %c0_i32_105 = arith.constant 0 : i32
        %152 = tpu.memref_slice %arg11[%151, %c0_i32_105] : memref<512x128xbf16, #tpu.memory_space<any>> -> memref<256x128xbf16, #tpu.memory_space<any>>
        %c0_i32_106 = arith.constant 0 : i32
        %c0_i32_107 = arith.constant 0 : i32
        %153 = tpu.memref_slice %arg18[%149, %c0_i32_106, %c0_i32_107] : memref<2x256x128xbf16, #tpu.memory_space<vmem>> -> memref<1x256x128xbf16, #tpu.memory_space<vmem>>
        %154 = tpu.memref_squeeze %153 : memref<1x256x128xbf16, #tpu.memory_space<vmem>> -> memref<256x128xbf16, #tpu.memory_space<vmem>>
        %155 = tpu.memref_slice %arg19[%149] : memref<2x!tpu.dma_semaphore, #tpu.memory_space<semaphore_mem>> -> memref<1x!tpu.dma_semaphore, #tpu.memory_space<semaphore_mem>>
        %156 = tpu.memref_squeeze %155 : memref<1x!tpu.dma_semaphore, #tpu.memory_space<semaphore_mem>> -> memref<!tpu.dma_semaphore, #tpu.memory_space<semaphore_mem>>
        tpu.enqueue_dma source(%152 : memref<256x128xbf16, #tpu.memory_space<any>>) target(%154 : memref<256x128xbf16, #tpu.memory_space<vmem>>) target_semaphore(%156 : memref<!tpu.dma_semaphore, #tpu.memory_space<semaphore_mem>>)
      } else {
      }
      %127 = arith.index_cast %117 : i32 to index
      %c0_88 = arith.constant 0 : index
      %c0_89 = arith.constant 0 : index
      %128 = vector.load %arg18[%127, %c0_88, %c0_89] : memref<2x256x128xbf16, #tpu.memory_space<vmem>>, vector<1x256x128xbf16>
      %129 = vector.shape_cast %128 : vector<1x256x128xbf16> to vector<256x128xbf16>
      %cst_90 = arith.constant dense<0.000000e+00> : vector<16x256xf32>
      %130 = tpu.matmul %90, %129, %cst_90 {dimension_numbers = #tpu.dot_dimension_numbers<[1], [1], [0], [0], [0, 0, 1, 0], [], []>} : vector<16x128xbf16>, vector<256x128xbf16>, vector<16x256xf32> -> vector<16x256xf32>
      %c0_91 = arith.constant 0 : index
      %c0_92 = arith.constant 0 : index
      %131 = vector.load %arg22[%c0_91, %c0_92] : memref<16x1xf32, #tpu.memory_space<vmem>>, vector<16x1xf32>
      %cst_93 = arith.constant dense<0xFF800000> : vector<16xf32>
      %132 = vector.multi_reduction <maximumf>, %130, %cst_93 [1] : vector<16x256xf32> to vector<16xf32>
      %133 = vector.shape_cast %132 : vector<16xf32> to vector<16x1xf32>
      %134 = arith.maximumf %131, %133 : vector<16x1xf32>
      %c0_94 = arith.constant 0 : index
      %c0_95 = arith.constant 0 : index
      %135 = vector.load %arg23[%c0_94, %c0_95] : memref<16x1xf32, #tpu.memory_space<vmem>>, vector<16x1xf32>
      %c0_96 = arith.constant 0 : index
      %c0_97 = arith.constant 0 : index
      %136 = vector.load %arg22[%c0_96, %c0_97] : memref<16x1xf32, #tpu.memory_space<vmem>>, vector<16x1xf32>
      %137 = arith.subf %136, %134 : vector<16x1xf32>
      %138 = math.exp %137 : vector<16x1xf32>
      %139 = arith.mulf %135, %138 : vector<16x1xf32>
      %140 = vector.broadcast %134 : vector<16x1xf32> to vector<16x256xf32>
      %141 = arith.subf %130, %140 : vector<16x256xf32>
      %142 = math.exp %141 : vector<16x256xf32>
      %cst_98 = arith.constant dense<0.000000e+00> : vector<16xf32>
      %143 = vector.multi_reduction <add>, %142, %cst_98 [1] : vector<16x256xf32> to vector<16xf32>
      %144 = vector.shape_cast %143 : vector<16xf32> to vector<16x1xf32>
      %145 = arith.addf %139, %144 : vector<16x1xf32>
      %c0_99 = arith.constant 0 : index
      %c0_100 = arith.constant 0 : index
      %146 = vector.load %arg23[%c0_99, %c0_100] : memref<16x1xf32, #tpu.memory_space<vmem>>, vector<16x1xf32>
      tpu.vector_store %arg23[%c0_99, %c0_100], %145 {strides = array<i32>} : memref<16x1xf32, #tpu.memory_space<vmem>>, vector<16x1xf32>,
      %c0_101 = arith.constant 0 : index
      %c0_102 = arith.constant 0 : index
      %147 = vector.load %arg22[%c0_101, %c0_102] : memref<16x1xf32, #tpu.memory_space<vmem>>, vector<16x1xf32>
      tpu.vector_store %arg22[%c0_101, %c0_102], %134 {strides = array<i32>} : memref<16x1xf32, #tpu.memory_space<vmem>>, vector<16x1xf32>,
    }
    %c2_i32_65 = arith.constant 2 : i32
    %c0_66 = arith.constant 0 : index
    %c0_67 = arith.constant 0 : index
    %98 = vector.load %arg22[%c0_66, %c0_67] : memref<16x1xf32, #tpu.memory_space<vmem>>, vector<16x1xf32>
    %c0_68 = arith.constant 0 : index
    %c0_69 = arith.constant 0 : index
    %99 = vector.load %arg23[%c0_68, %c0_69] : memref<16x1xf32, #tpu.memory_space<vmem>>, vector<16x1xf32>
    %100 = math.log %99 : vector<16x1xf32>
    %101 = arith.addf %98, %100 : vector<16x1xf32>
    %102 = arith.subf %101, %93 : vector<16x1xf32>
    %103 = vector.shape_cast %102 : vector<16x1xf32> to vector<1x16x1xf32>
    %cst_70 = arith.constant dense<0.000000e+00> : vector<1xf32>
    %104 = vector.multi_reduction <add>, %103, %cst_70 [1, 2] : vector<1x16x1xf32> to vector<1xf32>
    %105 = vector.shape_cast %104 : vector<1xf32> to vector<1x1x1xf32>
    %106 = vector.extract %105[0, 0, 0] : f32 from vector<1x1x1xf32>
    %cst_71 = arith.constant 1.250000e-01 : f32
    %107 = arith.mulf %106, %cst_71 : f32
    %108 = vector.broadcast %107 : f32 to vector<1x1xf32>
    %c0_72 = arith.constant 0 : index
    %c0_73 = arith.constant 0 : index
    %109 = vector.load %arg12[%c0_72, %c0_73] : memref<1x1xf32, #tpu.memory_space<vmem>>, vector<1x1xf32>
    tpu.vector_store %arg12[%c0_72, %c0_73], %108 {strides = array<i32>} : memref<1x1xf32, #tpu.memory_space<vmem>>, vector<1x1xf32>,
    %110 = arith.truncf %86 : vector<16x128xf32> to vector<16x128xbf16>
    %c0_74 = arith.constant 0 : index
    %c0_75 = arith.constant 0 : index
    %111 = vector.load %arg20[%c0_74, %c0_75] : memref<16x128xbf16, #tpu.memory_space<vmem>>, vector<16x128xbf16>
    tpu.vector_store %arg20[%c0_74, %c0_75], %110 {strides = array<i32>} : memref<16x128xbf16, #tpu.memory_space<vmem>>, vector<16x128xbf16>,
    %112 = tpu.assume_multiple %0, 8 : i32
    %c0_i32_76 = arith.constant 0 : i32
    %113 = tpu.memref_slice %arg17[%112, %c0_i32_76] : memref<512x128xbf16, #tpu.memory_space<any>> -> memref<16x128xbf16, #tpu.memory_space<any>>
    tpu.enqueue_dma source(%arg20 : memref<16x128xbf16, #tpu.memory_space<vmem>>) target(%113 : memref<16x128xbf16, #tpu.memory_space<any>>) target_semaphore(%arg21 : memref<!tpu.dma_semaphore, #tpu.memory_space<semaphore_mem>>)
    %c0_i32_77 = arith.constant 0 : i32
    %114 = tpu.memref_slice %arg17[%112, %c0_i32_77] : memref<512x128xbf16, #tpu.memory_space<any>> -> memref<16x128xbf16, #tpu.memory_space<any>>
    tpu.wait_dma2 semaphore(%arg21 : memref<!tpu.dma_semaphore, #tpu.memory_space<semaphore_mem>>) src(%arg20 : memref<16x128xbf16, #tpu.memory_space<vmem>>) dst(%114 : memref<16x128xbf16, #tpu.memory_space<any>>)
    return
  }
}

</mosaic_0001>

<llo_original>
// kernel: moco_forward.1
$region0: #{moco_forward.1}
  #allocation0 [shape = 'u32[]', space=smem, size = 0x4, offset = 0x4, fixed_abs, tag = 'smem constant byte address 0x4 - core index']
  #allocation1 [shape = 'u32[144,128]{1,0:T(1,128)}', space=vmem, size = 0x12000, scoped, tag = 'internal scratch']
  #allocation2 [shape = 'bf16[2,256,128]{2,1,0:T(16,128)(2,1)}', space=vmem, size = 0x20000, scoped, tag = 'scratch operand']
  #allocation3 [shape = 's32[2]{0}', space=sflag, size = 0x8, scoped, tag = 'scratch operand']
  #allocation4 [shape = 'bf16[16,128]{1,0:T(16,128)(2,1)}', space=vmem, size = 0x1000, scoped, tag = 'scratch operand']
  #allocation5 [shape = 's32[1]{0}', space=sflag, size = 0x4, scoped, tag = 'scratch operand']
  #allocation6 [shape = 'f32[16,1]{1,0:T(8,128)}', space=vmem, size = 0x2000, scoped, tag = 'scratch operand']
  #allocation7 [shape = 'f32[16,1]{1,0:T(8,128)}', space=vmem, size = 0x2000, scoped, tag = 'scratch operand']
  #allocation8 [shape = 's32[1]{0:T(128)S(6)}', space=smem, size = 0x200, scoped, tag = 'scoped memory for moco_forward.1']
  #allocation11 [shape = 's32[]', space=sflag, size = 0x4, offset = 0, fixed_abs, tag = 'sflag constant byte address 0x0 - dummy sync flag']
  #allocation12 [shape = 's32[]', space=sflag, size = 0x4, offset = 0, fixed_abs, tag = 'sflag constant byte address 0x0 - dummy sync flag']
  #allocation13 [shape = 's32[]', space=sflag, size = 0x4, offset = 0, fixed_abs, tag = 'sflag constant byte address 0x0 - dummy sync flag']
  %s0 = inlined_call_operand.<no memory space> [shape: s32[1], index: 0, kind: input, shape index: {}]
  %s1 = inlined_call_operand.vmem [shape: bf16[8,256], index: 1, kind: input, shape index: {}]
  %s2 = inlined_call_operand.vmem [shape: bf16[8,256], index: 2, kind: input, shape index: {}]
  %s3 = inlined_call_operand.vmem [shape: f32[256,256], index: 3, kind: input, shape index: {}]
  %s4 = inlined_call_operand.vmem [shape: f32[1,256], index: 4, kind: input, shape index: {}]
  %s5 = inlined_call_operand.vmem [shape: f32[256,128], index: 5, kind: input, shape index: {}]
  %s6 = inlined_call_operand.vmem [shape: f32[1,128], index: 6, kind: input, shape index: {}]
  %s7 = inlined_call_operand.vmem [shape: f32[256,256], index: 7, kind: input, shape index: {}, may-alias: {7,13}]
  %s8 = inlined_call_operand.vmem [shape: f32[1,256], index: 8, kind: input, shape index: {}, may-alias: {8,14}]
  %s9 = inlined_call_operand.vmem [shape: f32[256,128], index: 9, kind: input, shape index: {}, may-alias: {9,15}]
  %s10 = inlined_call_operand.vmem [shape: f32[1,128], index: 10, kind: input, shape index: {}, may-alias: {10,16}]
  %s11 = inlined_call_operand.vmem [shape: bf16[512,128], index: 11, kind: input, shape index: {}, may-alias: {11,17}]
  %s12 = inlined_call_operand.hbm [shape: f32[1,1], index: 12, kind: output, shape index: {0}]
  %s13 = inlined_call_operand.vmem [shape: f32[256,256], index: 13, kind: output, shape index: {1}, may-alias: {7,13}]
  %s14 = inlined_call_operand.vmem [shape: f32[1,256], index: 14, kind: output, shape index: {2}, may-alias: {8,14}]
  %s15 = inlined_call_operand.vmem [shape: f32[256,128], index: 15, kind: output, shape index: {3}, may-alias: {9,15}]
  %s16 = inlined_call_operand.vmem [shape: f32[1,128], index: 16, kind: output, shape index: {4}, may-alias: {10,16}]
  %s17 = inlined_call_operand.vmem [shape: bf16[512,128], index: 17, kind: output, shape index: {5}, may-alias: {11,17}]
  %18 = xla_tuple %s12, %s13, %s14, %s15, %s16, %s17
  %s19 = sld [smem:[#allocation0]]
  $region199: #{moco_forward.1} parent=0
    _
  %s21 = ssub.s32 1, %s19
  %s22 = scalar_select 0, %s21, %s19
  %23 = sst [smem:[#allocation8]] %s0
  $region1: #{moco_forward.1} parent=0
    #allocation9 [shape = 'u8[512]{0}', space=vmem, size = 0x400, scoped, tag = 'output window, operand 0, single buffered']
    #allocation10 [shape = 's32[1]{0}', space=sflag, size = 0x4, scoped, tag = 'scoped memory for moco_forward.1']
    %24 = vsyncpa [#allocation10], 0
    // Predicated region
    $region2: #{moco_forward.1} parent=1 // pred_check
      _
    $region3: #{moco_forward.1} parent=1 // pred_check_branch
      %26 = sbr.rel (0) target = $region5
    $region4: #{moco_forward.1} parent=1 // pred_region
      _
    $region5: #{moco_forward.1} parent=1 // pred_fallthru
      _
    // Predicated region
    $region6: #{moco_forward.1} parent=1 // pred_check
      _
    $region7: #{moco_forward.1} parent=1 // pred_check_branch
      %28 = sbr.rel (0) target = $region9
    $region8: #{moco_forward.1} parent=1 // pred_region
      _
    $region9: #{moco_forward.1} parent=1 // pred_fallthru
      _
    // Predicated region
    $region10: #{moco_forward.1} parent=1 // pred_check
      _
    $region11: #{moco_forward.1} parent=1 // pred_check_branch
      %30 = sbr.rel (0) target = $region13
    $region12: #{moco_forward.1} parent=1 // pred_region
      _
    $region13: #{moco_forward.1} parent=1 // pred_fallthru
      _
    // Predicated region
    $region14: #{moco_forward.1} parent=1 // pred_check
      _
    $region15: #{moco_forward.1} parent=1 // pred_check_branch
      %32 = sbr.rel (0) target = $region17
    $region16: #{moco_forward.1} parent=1 // pred_region
      _
    $region17: #{moco_forward.1} parent=1 // pred_fallthru
      _
    // Predicated region
    $region18: #{moco_forward.1} parent=1 // pred_check
      _
    $region19: #{moco_forward.1} parent=1 // pred_check_branch
      %34 = sbr.rel (0) target = $region21
    $region20: #{moco_forward.1} parent=1 // pred_region
      _
    $region21: #{moco_forward.1} parent=1 // pred_fallthru
      _
    // Predicated region
    $region22: #{moco_forward.1} parent=1 // pred_check
      _
    $region23: #{moco_forward.1} parent=1 // pred_check_branch
      %36 = sbr.rel (0) target = $region25
    $region24: #{moco_forward.1} parent=1 // pred_region
      _
    $region25: #{moco_forward.1} parent=1 // pred_fallthru
      _
    // Predicated region
    $region26: #{moco_forward.1} parent=1 // pred_check
      _
    $region27: #{moco_forward.1} parent=1 // pred_check_branch
      %38 = sbr.rel (0) target = $region29
    $region28: #{moco_forward.1} parent=1 // pred_region
      _
    $region29: #{moco_forward.1} parent=1 // pred_fallthru
      _
    // Predicated region
    $region30: #{moco_forward.1} parent=1 // pred_check
      _
    $region31: #{moco_forward.1} parent=1 // pred_check_branch
      %40 = sbr.rel (0) target = $region33
    $region32: #{moco_forward.1} parent=1 // pred_region
      _
    $region33: #{moco_forward.1} parent=1 // pred_fallthru
      _
    // Predicated region
    $region34: #{moco_forward.1} parent=1 // pred_check
      _
    $region35: #{moco_forward.1} parent=1 // pred_check_branch
      %42 = sbr.rel (0) target = $region37
    $region36: #{moco_forward.1} parent=1 // pred_region
      _
    $region37: #{moco_forward.1} parent=1 // pred_fallthru
      _
    // Predicated region
    $region38: #{moco_forward.1} parent=1 // pred_check
      _
    $region39: #{moco_forward.1} parent=1 // pred_check_branch
      %44 = sbr.rel (0) target = $region41
    $region40: #{moco_forward.1} parent=1 // pred_region
      _
    $region41: #{moco_forward.1} parent=1 // pred_fallthru
      _
    // Predicated region
    $region42: #{moco_forward.1} parent=1 // pred_check
      _
    $region43: #{moco_forward.1} parent=1 // pred_check_branch
      %46 = sbr.rel (0) target = $region45
    $region44: #{moco_forward.1} parent=1 // pred_region
      _
    $region45: #{moco_forward.1} parent=1 // pred_fallthru
      _
    %s48 = sld [smem:[#allocation8]]
    %p50 = scmp.lt.u32.totalorder 128, 8
    %p51 = pneg %p50
    // Predicated region
    $region46: #{moco_forward.1} parent=1 // pred_check
      _
    $region47: #{moco_forward.1} parent=1 // pred_check_branch
      %53 = sbr.rel (%p50) target = $region49
    $region48: #{moco_forward.1} parent=1 // pred_region
      %s68 = sand.u32 128, 7
      %p69 = scmp.eq.s32.totalorder %s68, 0
      // Predicated region
      $region61: #{moco_forward.1} parent=48 // pred_check
        %p70 = pneg %p69
      $region62: #{moco_forward.1} parent=48 // pred_check_branch
        %72 = sbr.rel (%p70) target = $region64
      $region63: #{moco_forward.1} parent=48 // pred_region
        loop: start=0, step=1, limit=1
        $region65: #{moco_forward.1} parent=63 // loop_pre_header
          _
        $region66: #{moco_forward.1} parent=63 // loop_header
          %s74 = sphi 0, %s78
          %p75 = scmp.ge.s32.totalorder %s74, 1
          %s79 = sphi %s11, %s11
          %s80 = sphi [#allocation2], [#allocation2]
        $region67: #{moco_forward.1} parent=63 // loop_header_branch
          %77 = sbr.rel (%p75) target = $region71
        $region68: #{moco_forward.1} parent=63 // loop_body
          %v81 = vld [vmem:[%s79] sm:$0xff]
          %82 = vst [vmem:[%s80] sm:$0xff] %v81
          %v83 = vld [vmem:[%s79 + $0x8] sm:$0xff]
          %84 = vst [vmem:[%s80 + $0x8] sm:$0xff] %v83
          %v85 = vld [vmem:[%s79 + $0x10] sm:$0xff]
          %86 = vst [vmem:[%s80 + $0x10] sm:$0xff] %v85
          %v87 = vld [vmem:[%s79 + $0x18] sm:$0xff]
          %88 = vst [vmem:[%s80 + $0x18] sm:$0xff] %v87
          %v89 = vld [vmem:[%s79 + $0x20] sm:$0xff]
          %90 = vst [vmem:[%s80 + $0x20] sm:$0xff] %v89
          %v91 = vld [vmem:[%s79 + $0x28] sm:$0xff]
          %92 = vst [vmem:[%s80 + $0x28] sm:$0xff] %v91
          %v93 = vld [vmem:[%s79 + $0x30] sm:$0xff]
          %94 = vst [vmem:[%s80 + $0x30] sm:$0xff] %v93
          %v95 = vld [vmem:[%s79 + $0x38] sm:$0xff]
          %96 = vst [vmem:[%s80 + $0x38] sm:$0xff] %v95
          %v97 = vld [vmem:[%s79 + $0x40] sm:$0xff]
          %98 = vst [vmem:[%s80 + $0x40] sm:$0xff] %v97
          %v99 = vld [vmem:[%s79 + $0x48] sm:$0xff]
          %100 = vst [vmem:[%s80 + $0x48] sm:$0xff] %v99
          %v101 = vld [vmem:[%s79 + $0x50] sm:$0xff]
          %102 = vst [vmem:[%s80 + $0x50] sm:$0xff] %v101
          %v103 = vld [vmem:[%s79 + $0x58] sm:$0xff]
          %104 = vst [vmem:[%s80 + $0x58] sm:$0xff] %v103
          %v105 = vld [vmem:[%s79 + $0x60] sm:$0xff]
          %106 = vst [vmem:[%s80 + $0x60] sm:$0xff] %v105
          %v107 = vld [vmem:[%s79 + $0x68] sm:$0xff]
          %108 = vst [vmem:[%s80 + $0x68] sm:$0xff] %v107
          %v109 = vld [vmem:[%s79 + $0x70] sm:$0xff]
          %110 = vst [vmem:[%s80 + $0x70] sm:$0xff] %v109
          %v111 = vld [vmem:[%s79 + $0x78] sm:$0xff]
          %112 = vst [vmem:[%s80 + $0x78] sm:$0xff] %v111
        $region69: #{moco_forward.1} parent=63 // loop_footer
          %s78 = sadd.s32 1, %s74
        $region70: #{moco_forward.1} parent=63 // loop_footer_branch
          %73 = sbr.rel target = $region66
        $region71: #{moco_forward.1} parent=63 // loop_exit
          _
      $region64: #{moco_forward.1} parent=48 // pred_fallthru
        _
      %p113 = pneg %p69
      // Predicated region
      $region72: #{moco_forward.1} parent=48 // pred_check
        _
      $region73: #{moco_forward.1} parent=48 // pred_check_branch
        %115 = sbr.rel (%p69) target = $region75
      $region74: #{moco_forward.1} parent=48 // pred_region
        %s116 = sand.u32 128, 7
      $region75: #{moco_forward.1} parent=48 // pred_fallthru
        _
    $region49: #{moco_forward.1} parent=1 // pred_fallthru
      _
    // Predicated region
    $region50: #{moco_forward.1} parent=1 // pred_check
      %p54 = pneg %p50
    $region51: #{moco_forward.1} parent=1 // pred_check_branch
      %56 = sbr.rel (%p54) target = $region53
    $region52: #{moco_forward.1} parent=1 // pred_region
      %s57 = sshllo.u32 0, 128
      loop: start=0, step=1, limit=1
      $region54: #{moco_forward.1} parent=52 // loop_pre_header
        _
      $region55: #{moco_forward.1} parent=52 // loop_header
        %s59 = sphi 0, %s63
        %p60 = scmp.ge.s32.totalorder %s59, 1
        %s64 = sphi %s11, %s11
        %s65 = sphi [#allocation2], [#allocation2]
      $region56: #{moco_forward.1} parent=52 // loop_header_branch
        %62 = sbr.rel (%p60) target = $region60
      $region57: #{moco_forward.1} parent=52 // loop_body
        %v66 = vld [vmem:[%s64] sm:%s57]
        %67 = vst [vmem:[%s65] sm:%s57] %v66
      $region58: #{moco_forward.1} parent=52 // loop_footer
        %s63 = sadd.s32 1, %s59
      $region59: #{moco_forward.1} parent=52 // loop_footer_branch
        %58 = sbr.rel target = $region55
      $region60: #{moco_forward.1} parent=52 // loop_exit
        _
    $region53: #{moco_forward.1} parent=1 // pred_fallthru
      _
    // Predicated region
    $region76: #{moco_forward.1} parent=1 // pred_check
      _
    $region77: #{moco_forward.1} parent=1 // pred_check_branch
      %119 = sbr.rel (0) target = $region79
    $region78: #{moco_forward.1} parent=1 // pred_region
      %120 = vsyncadd [#allocation3], 2048
    $region79: #{moco_forward.1} parent=1 // pred_fallthru
      _
    %v121 = vld [vmem:[%s7] sm:$0xff]
    %v122 = vld [vmem:[%s7 + $0x8] sm:$0xff]
    %v123 = vld [vmem:[%s7 + $0x10] sm:$0xff]
    %v124 = vld [vmem:[%s7 + $0x18] sm:$0xff]
    %v125 = vld [vmem:[%s7 + $0x20] sm:$0xff]
    %v126 = vld [vmem:[%s7 + $0x28] sm:$0xff]
    %v127 = vld [vmem:[%s7 + $0x30] sm:$0xff]
    %v128 = vld [vmem:[%s7 + $0x38] sm:$0xff]
    %v129 = vld [vmem:[%s7 + $0x40] sm:$0xff]
    %v130 = vld [vmem:[%s7 + $0x48] sm:$0xff]
    %v131 = vld [vmem:[%s7 + $0x50] sm:$0xff]
    %v132 = vld [vmem:[%s7 + $0x58] sm:$0xff]
    %v133 = vld [vmem:[%s7 + $0x60] sm:$0xff]
    %v134 = vld [vmem:[%s7 + $0x68] sm:$0xff]
    %v135 = vld [vmem:[%s7 + $0x70] sm:$0xff]
    %v136 = vld [vmem:[%s7 + $0x78] sm:$0xff]
    %v137 = vld [vmem:[%s7 + $0x80] sm:$0xff]
    %v138 = vld [vmem:[%s7 + $0x88] sm:$0xff]
    %v139 = vld [vmem:[%s7 + $0x90] sm:$0xff]
    %v140 = vld [vmem:[%s7 + $0x98] sm:$0xff]
    %v141 = vld [vmem:[%s7 + $0xa0] sm:$0xff]
    %v142 = vld [vmem:[%s7 + $0xa8] sm:$0xff]
    %v143 = vld [vmem:[%s7 + $0xb0] sm:$0xff]
    %v144 = vld [vmem:[%s7 + $0xb8] sm:$0xff]
    %v145 = vld [vmem:[%s7 + $0xc0] sm:$0xff]
    %v146 = vld [vmem:[%s7 + $0xc8] sm:$0xff]
    %v147 = vld [vmem:[%s7 + $0xd0] sm:$0xff]
    %v148 = vld [vmem:[%s7 + $0xd8] sm:$0xff]
    %v149 = vld [vmem:[%s7 + $0xe0] sm:$0xff]
    %v150 = vld [vmem:[%s7 + $0xe8] sm:$0xff]
    %v151 = vld [vmem:[%s7 + $0xf0] sm:$0xff]
    %v152 = vld [vmem:[%s7 + $0xf8] sm:$0xff]
    %v153 = vld [vmem:[%s7 + $0x100] sm:$0xff]
    %v154 = vld [vmem:[%s7 + $0x108] sm:$0xff]
    %v155 = vld [vmem:[%s7 + $0x110] sm:$0xff]
    %v156 = vld [vmem:[%s7 + $0x118] sm:$0xff]
    %v157 = vld [vmem:[%s7 + $0x120] sm:$0xff]
    %v158 = vld [vmem:[%s7 + $0x128] sm:$0xff]
    %v159 = vld [vmem:[%s7 + $0x130] sm:$0xff]
    %v160 = vld [vmem:[%s7 + $0x138] sm:$0xff]
    %v161 = vld [vmem:[%s7 + $0x140] sm:$0xff]
    %v162 = vld [vmem:[%s7 + $0x148] sm:$0xff]
    %v163 = vld [vmem:[%s7 + $0x150] sm:$0xff]
    %v164 = vld [vmem:[%s7 + $0x158] sm:$0xff]
    %v165 = vld [vmem:[%s7 + $0x160] sm:$0xff]
    %v166 = vld [vmem:[%s7 + $0x168] sm:$0xff]
    %v167 = vld [vmem:[%s7 + $0x170] sm:$0xff]
    %v168 = vld [vmem:[%s7 + $0x178] sm:$0xff]
    %v169 = vld [vmem:[%s7 + $0x180] sm:$0xff]
    %v170 = vld [vmem:[%s7 + $0x188] sm:$0xff]
    %v171 = vld [vmem:[%s7 + $0x190] sm:$0xff]
    %v172 = vld [vmem:[%s7 + $0x198] sm:$0xff]
    %v173 = vld [vmem:[%s7 + $0x1a0] sm:$0xff]
    %v174 = vld [vmem:[%s7 + $0x1a8] sm:$0xff]
    %v175 = vld [vmem:[%s7 + $0x1b0] sm:$0xff]
    %v176 = vld [vmem:[%s7 + $0x1b8] sm:$0xff]
    %v177 = vld [vmem:[%s7 + $0x1c0] sm:$0xff]
    %v178 = vld [vmem:[%s7 + $0x1c8] sm:$0xff]
    %v179 = vld [vmem:[%s7 + $0x1d0] sm:$0xff]
    %v180 = vld [vmem:[%s7 + $0x1d8] sm:$0xff]
    %v181 = vld [vmem:[%s7 + $0x1e0] sm:$0xff]
    %v182 = vld [vmem:[%s7 + $0x1e8] sm:$0xff]
    %v183 = vld [vmem:[%s7 + $0x1f0] sm:$0xff]
    %v184 = vld [vmem:[%s7 + $0x1f8] sm:$0xff]
    %v185 = vmul.f32 %v121, 0.999
    %v186 = vmul.f32 %v122, 0.999
    %v187 = vmul.f32 %v123, 0.999
    %v188 = vmul.f32 %v124, 0.999
    %v189 = vmul.f32 %v125, 0.999
    %v190 = vmul.f32 %v126, 0.999
    %v191 = vmul.f32 %v127, 0.999
    %v192 = vmul.f32 %v128, 0.999
    %v193 = vmul.f32 %v129, 0.999
    %v194 = vmul.f32 %v130, 0.999
    %v195 = vmul.f32 %v131, 0.999
    %v196 = vmul.f32 %v132, 0.999
    %v197 = vmul.f32 %v133, 0.999
    %v198 = vmul.f32 %v134, 0.999
    %v199 = vmul.f32 %v135, 0.999
    %v200 = vmul.f32 %v136, 0.999
    %v201 = vmul.f32 %v137, 0.999
    %v202 = vmul.f32 %v138, 0.999
    %v203 = vmul.f32 %v139, 0.999
    %v204 = vmul.f32 %v140, 0.999
    %v205 = vmul.f32 %v141, 0.999
    %v206 = vmul.f32 %v142, 0.999
    %v207 = vmul.f32 %v143, 0.999
    %v208 = vmul.f32 %v144, 0.999
    %v209 = vmul.f32 %v145, 0.999
    %v210 = vmul.f32 %v146, 0.999
    %v211 = vmul.f32 %v147, 0.999
    %v212 = vmul.f32 %v148, 0.999
    %v213 = vmul.f32 %v149, 0.999
    %v214 = vmul.f32 %v150, 0.999
    %v215 = vmul.f32 %v151, 0.999
    %v216 = vmul.f32 %v152, 0.999
    %v217 = vmul.f32 %v153, 0.999
    %v218 = vmul.f32 %v154, 0.999
    %v219 = vmul.f32 %v155, 0.999
    %v220 = vmul.f32 %v156, 0.999
    %v221 = vmul.f32 %v157, 0.999
    %v222 = vmul.f32 %v158, 0.999
    %v223 = vmul.f32 %v159, 0.999
    %v224 = vmul.f32 %v160, 0.999
    %v225 = vmul.f32 %v161, 0.999
    %v226 = vmul.f32 %v162, 0.999
    %v227 = vmul.f32 %v163, 0.999
    %v228 = vmul.f32 %v164, 0.999
    %v229 = vmul.f32 %v165, 0.999
    %v230 = vmul.f32 %v166, 0.999
    %v231 = vmul.f32 %v167, 0.999
    %v232 = vmul.f32 %v168, 0.999
    %v233 = vmul.f32 %v169, 0.999
    %v234 = vmul.f32 %v170, 0.999
    %v235 = vmul.f32 %v171, 0.999
    %v236 = vmul.f32 %v172, 0.999
    %v237 = vmul.f32 %v173, 0.999
    %v238 = vmul.f32 %v174, 0.999
    %v239 = vmul.f32 %v175, 0.999
    %v240 = vmul.f32 %v176, 0.999
    %v241 = vmul.f32 %v177, 0.999
    %v242 = vmul.f32 %v178, 0.999
    %v243 = vmul.f32 %v179, 0.999
    %v244 = vmul.f32 %v180, 0.999
    %v245 = vmul.f32 %v181, 0.999
    %v246 = vmul.f32 %v182, 0.999
    %v247 = vmul.f32 %v183, 0.999
    %v248 = vmul.f32 %v184, 0.999
    %v249 = vld [vmem:[%s3] sm:$0xff]
    %v250 = vld [vmem:[%s3 + $0x8] sm:$0xff]
    %v251 = vld [vmem:[%s3 + $0x10] sm:$0xff]
    %v252 = vld [vmem:[%s3 + $0x18] sm:$0xff]
    %v253 = vld [vmem:[%s3 + $0x20] sm:$0xff]
    %v254 = vld [vmem:[%s3 + $0x28] sm:$0xff]
    %v255 = vld [vmem:[%s3 + $0x30] sm:$0xff]
    %v256 = vld [vmem:[%s3 + $0x38] sm:$0xff]
    %v257 = vld [vmem:[%s3 + $0x40] sm:$0xff]
    %v258 = vld [vmem:[%s3 + $0x48] sm:$0xff]
    %v259 = vld [vmem:[%s3 + $0x50] sm:$0xff]
    %v260 = vld [vmem:[%s3 + $0x58] sm:$0xff]
    %v261 = vld [vmem:[%s3 + $0x60] sm:$0xff]
    %v262 = vld [vmem:[%s3 + $0x68] sm:$0xff]
    %v263 = vld [vmem:[%s3 + $0x70] sm:$0xff]
    %v264 = vld [vmem:[%s3 + $0x78] sm:$0xff]
    %v265 = vld [vmem:[%s3 + $0x80] sm:$0xff]
    %v266 = vld [vmem:[%s3 + $0x88] sm:$0xff]
    %v267 = vld [vmem:[%s3 + $0x90] sm:$0xff]
    %v268 = vld [vmem:[%s3 + $0x98] sm:$0xff]
    %v269 = vld [vmem:[%s3 + $0xa0] sm:$0xff]
    %v270 = vld [vmem:[%s3 + $0xa8] sm:$0xff]
    %v271 = vld [vmem:[%s3 + $0xb0] sm:$0xff]
    %v272 = vld [vmem:[%s3 + $0xb8] sm:$0xff]
    %v273 = vld [vmem:[%s3 + $0xc0] sm:$0xff]
    %v274 = vld [vmem:[%s3 + $0xc8] sm:$0xff]
    %v275 = vld [vmem:[%s3 + $0xd0] sm:$0xff]
    %v276 = vld [vmem:[%s3 + $0xd8] sm:$0xff]
    %v277 = vld [vmem:[%s3 + $0xe0] sm:$0xff]
    %v278 = vld [vmem:[%s3 + $0xe8] sm:$0xff]
    %v279 = vld [vmem:[%s3 + $0xf0] sm:$0xff]
    %v280 = vld [vmem:[%s3 + $0xf8] sm:$0xff]
    %v281 = vld [vmem:[%s3 + $0x100] sm:$0xff]
    %v282 = vld [vmem:[%s3 + $0x108] sm:$0xff]
    %v283 = vld [vmem:[%s3 + $0x110] sm:$0xff]
    %v284 = vld [vmem:[%s3 + $0x118] sm:$0xff]
    %v285 = vld [vmem:[%s3 + $0x120] sm:$0xff]
    %v286 = vld [vmem:[%s3 + $0x128] sm:$0xff]
    %v287 = vld [vmem:[%s3 + $0x130] sm:$0xff]
    %v288 = vld [vmem:[%s3 + $0x138] sm:$0xff]
    %v289 = vld [vmem:[%s3 + $0x140] sm:$0xff]
    %v290 = vld [vmem:[%s3 + $0x148] sm:$0xff]
    %v291 = vld [vmem:[%s3 + $0x150] sm:$0xff]
    %v292 = vld [vmem:[%s3 + $0x158] sm:$0xff]
    %v293 = vld [vmem:[%s3 + $0x160] sm:$0xff]
    %v294 = vld [vmem:[%s3 + $0x168] sm:$0xff]
    %v295 = vld [vmem:[%s3 + $0x170] sm:$0xff]
    %v296 = vld [vmem:[%s3 + $0x178] sm:$0xff]
    %v297 = vld [vmem:[%s3 + $0x180] sm:$0xff]
    %v298 = vld [vmem:[%s3 + $0x188] sm:$0xff]
    %v299 = vld [vmem:[%s3 + $0x190] sm:$0xff]
    %v300 = vld [vmem:[%s3 + $0x198] sm:$0xff]
    %v301 = vld [vmem:[%s3 + $0x1a0] sm:$0xff]
    %v302 = vld [vmem:[%s3 + $0x1a8] sm:$0xff]
    %v303 = vld [vmem:[%s3 + $0x1b0] sm:$0xff]
    %v304 = vld [vmem:[%s3 + $0x1b8] sm:$0xff]
    %v305 = vld [vmem:[%s3 + $0x1c0] sm:$0xff]
    %v306 = vld [vmem:[%s3 + $0x1c8] sm:$0xff]
    %v307 = vld [vmem:[%s3 + $0x1d0] sm:$0xff]
    %v308 = vld [vmem:[%s3 + $0x1d8] sm:$0xff]
    %v309 = vld [vmem:[%s3 + $0x1e0] sm:$0xff]
    %v310 = vld [vmem:[%s3 + $0x1e8] sm:$0xff]
    %v311 = vld [vmem:[%s3 + $0x1f0] sm:$0xff]
    %v312 = vld [vmem:[%s3 + $0x1f8] sm:$0xff]
    %v313 = vmul.f32 %v249, 0.001
    %v314 = vmul.f32 %v250, 0.001
    %v315 = vmul.f32 %v251, 0.001
    %v316 = vmul.f32 %v252, 0.001
    %v317 = vmul.f32 %v253, 0.001
    %v318 = vmul.f32 %v254, 0.001
    %v319 = vmul.f32 %v255, 0.001
    %v320 = vmul.f32 %v256, 0.001
    %v321 = vmul.f32 %v257, 0.001
    %v322 = vmul.f32 %v258, 0.001
    %v323 = vmul.f32 %v259, 0.001
    %v324 = vmul.f32 %v260, 0.001
    %v325 = vmul.f32 %v261, 0.001
    %v326 = vmul.f32 %v262, 0.001
    %v327 = vmul.f32 %v263, 0.001
    %v328 = vmul.f32 %v264, 0.001
    %v329 = vmul.f32 %v265, 0.001
    %v330 = vmul.f32 %v266, 0.001
    %v331 = vmul.f32 %v267, 0.001
    %v332 = vmul.f32 %v268, 0.001
    %v333 = vmul.f32 %v269, 0.001
    %v334 = vmul.f32 %v270, 0.001
    %v335 = vmul.f32 %v271, 0.001
    %v336 = vmul.f32 %v272, 0.001
    %v337 = vmul.f32 %v273, 0.001
    %v338 = vmul.f32 %v274, 0.001
    %v339 = vmul.f32 %v275, 0.001
    %v340 = vmul.f32 %v276, 0.001
    %v341 = vmul.f32 %v277, 0.001
    %v342 = vmul.f32 %v278, 0.001
    %v343 = vmul.f32 %v279, 0.001
    %v344 = vmul.f32 %v280, 0.001
    %v345 = vmul.f32 %v281, 0.001
    %v346 = vmul.f32 %v282, 0.001
    %v347 = vmul.f32 %v283, 0.001
    %v348 = vmul.f32 %v284, 0.001
    %v349 = vmul.f32 %v285, 0.001
    %v350 = vmul.f32 %v286, 0.001
    %v351 = vmul.f32 %v287, 0.001
    %v352 = vmul.f32 %v288, 0.001
    %v353 = vmul.f32 %v289, 0.001
    %v354 = vmul.f32 %v290, 0.001
    %v355 = vmul.f32 %v291, 0.001
    %v356 = vmul.f32 %v292, 0.001
    %v357 = vmul.f32 %v293, 0.001
    %v358 = vmul.f32 %v294, 0.001
    %v359 = vmul.f32 %v295, 0.001
    %v360 = vmul.f32 %v296, 0.001
    %v361 = vmul.f32 %v297, 0.001
    %v362 = vmul.f32 %v298, 0.001
    %v363 = vmul.f32 %v299, 0.001
    %v364 = vmul.f32 %v300, 0.001
    %v365 = vmul.f32 %v301, 0.001
    %v366 = vmul.f32 %v302, 0.001
    %v367 = vmul.f32 %v303, 0.001
    %v368 = vmul.f32 %v304, 0.001
    %v369 = vmul.f32 %v305, 0.001
    %v370 = vmul.f32 %v306, 0.001
    %v371 = vmul.f32 %v307, 0.001
    %v372 = vmul.f32 %v308, 0.001
    %v373 = vmul.f32 %v309, 0.001
    %v374 = vmul.f32 %v310, 0.001
    %v375 = vmul.f32 %v311, 0.001
    %v376 = vmul.f32 %v312, 0.001
    %v377 = vadd.f32 %v185, %v313
    %v378 = vadd.f32 %v186, %v314
    %v379 = vadd.f32 %v187, %v315
    %v380 = vadd.f32 %v188, %v316
    %v381 = vadd.f32 %v189, %v317
    %v382 = vadd.f32 %v190, %v318
    %v383 = vadd.f32 %v191, %v319
    %v384 = vadd.f32 %v192, %v320
    %v385 = vadd.f32 %v193, %v321
    %v386 = vadd.f32 %v194, %v322
    %v387 = vadd.f32 %v195, %v323
    %v388 = vadd.f32 %v196, %v324
    %v389 = vadd.f32 %v197, %v325
    %v390 = vadd.f32 %v198, %v326
    %v391 = vadd.f32 %v199, %v327
    %v392 = vadd.f32 %v200, %v328
    %v393 = vadd.f32 %v201, %v329
    %v394 = vadd.f32 %v202, %v330
    %v395 = vadd.f32 %v203, %v331
    %v396 = vadd.f32 %v204, %v332
    %v397 = vadd.f32 %v205, %v333
    %v398 = vadd.f32 %v206, %v334
    %v399 = vadd.f32 %v207, %v335
    %v400 = vadd.f32 %v208, %v336
    %v401 = vadd.f32 %v209, %v337
    %v402 = vadd.f32 %v210, %v338
    %v403 = vadd.f32 %v211, %v339
    %v404 = vadd.f32 %v212, %v340
    %v405 = vadd.f32 %v213, %v341
    %v406 = vadd.f32 %v214, %v342
    %v407 = vadd.f32 %v215, %v343
    %v408 = vadd.f32 %v216, %v344
    %v409 = vadd.f32 %v217, %v345
    %v410 = vadd.f32 %v218, %v346
    %v411 = vadd.f32 %v219, %v347
    %v412 = vadd.f32 %v220, %v348
    %v413 = vadd.f32 %v221, %v349
    %v414 = vadd.f32 %v222, %v350
    %v415 = vadd.f32 %v223, %v351
    %v416 = vadd.f32 %v224, %v352
    %v417 = vadd.f32 %v225, %v353
    %v418 = vadd.f32 %v226, %v354
    %v419 = vadd.f32 %v227, %v355
    %v420 = vadd.f32 %v228, %v356
    %v421 = vadd.f32 %v229, %v357
    %v422 = vadd.f32 %v230, %v358
    %v423 = vadd.f32 %v231, %v359
    %v424 = vadd.f32 %v232, %v360
    %v425 = vadd.f32 %v233, %v361
    %v426 = vadd.f32 %v234, %v362
    %v427 = vadd.f32 %v235, %v363
    %v428 = vadd.f32 %v236, %v364
    %v429 = vadd.f32 %v237, %v365
    %v430 = vadd.f32 %v238, %v366
    %v431 = vadd.f32 %v239, %v367
    %v432 = vadd.f32 %v240, %v368
    %v433 = vadd.f32 %v241, %v369
    %v434 = vadd.f32 %v242, %v370
    %v435 = vadd.f32 %v243, %v371
    %v436 = vadd.f32 %v244, %v372
    %v437 = vadd.f32 %v245, %v373
    %v438 = vadd.f32 %v246, %v374
    %v439 = vadd.f32 %v247, %v375
    %v440 = vadd.f32 %v248, %v376
    %v441 = vld [vmem:[%s8] sm:$0x3]
    %v442 = vmul.f32 %v441, 0.999
    %v443 = vld [vmem:[%s4] sm:$0x3]
    %v444 = vmul.f32 %v443, 0.001
    %v445 = vadd.f32 %v442, %v444
    %v446 = vld [vmem:[%s9] sm:$0xff]
    %v447 = vld [vmem:[%s9 + $0x8] sm:$0xff]
    %v448 = vld [vmem:[%s9 + $0x10] sm:$0xff]
    %v449 = vld [vmem:[%s9 + $0x18] sm:$0xff]
    %v450 = vld [vmem:[%s9 + $0x20] sm:$0xff]
    %v451 = vld [vmem:[%s9 + $0x28] sm:$0xff]
    %v452 = vld [vmem:[%s9 + $0x30] sm:$0xff]
    %v453 = vld [vmem:[%s9 + $0x38] sm:$0xff]
    %v454 = vld [vmem:[%s9 + $0x40] sm:$0xff]
    %v455 = vld [vmem:[%s9 + $0x48] sm:$0xff]
    %v456 = vld [vmem:[%s9 + $0x50] sm:$0xff]
    %v457 = vld [vmem:[%s9 + $0x58] sm:$0xff]
    %v458 = vld [vmem:[%s9 + $0x60] sm:$0xff]
    %v459 = vld [vmem:[%s9 + $0x68] sm:$0xff]
    %v460 = vld [vmem:[%s9 + $0x70] sm:$0xff]
    %v461 = vld [vmem:[%s9 + $0x78] sm:$0xff]
    %v462 = vld [vmem:[%s9 + $0x80] sm:$0xff]
    %v463 = vld [vmem:[%s9 + $0x88] sm:$0xff]
    %v464 = vld [vmem:[%s9 + $0x90] sm:$0xff]
    %v465 = vld [vmem:[%s9 + $0x98] sm:$0xff]
    %v466 = vld [vmem:[%s9 + $0xa0] sm:$0xff]
    %v467 = vld [vmem:[%s9 + $0xa8] sm:$0xff]
    %v468 = vld [vmem:[%s9 + $0xb0] sm:$0xff]
    %v469 = vld [vmem:[%s9 + $0xb8] sm:$0xff]
    %v470 = vld [vmem:[%s9 + $0xc0] sm:$0xff]
    %v471 = vld [vmem:[%s9 + $0xc8] sm:$0xff]
    %v472 = vld [vmem:[%s9 + $0xd0] sm:$0xff]
    %v473 = vld [vmem:[%s9 + $0xd8] sm:$0xff]
    %v474 = vld [vmem:[%s9 + $0xe0] sm:$0xff]
    %v475 = vld [vmem:[%s9 + $0xe8] sm:$0xff]
    %v476 = vld [vmem:[%s9 + $0xf0] sm:$0xff]
    %v477 = vld [vmem:[%s9 + $0xf8] sm:$0xff]
    %v478 = vmul.f32 %v446, 0.999
    %v479 = vmul.f32 %v447, 0.999
    %v480 = vmul.f32 %v448, 0.999
    %v481 = vmul.f32 %v449, 0.999
    %v482 = vmul.f32 %v450, 0.999
    %v483 = vmul.f32 %v451, 0.999
    %v484 = vmul.f32 %v452, 0.999
    %v485 = vmul.f32 %v453, 0.999
    %v486 = vmul.f32 %v454, 0.999
    %v487 = vmul.f32 %v455, 0.999
    %v488 = vmul.f32 %v456, 0.999
    %v489 = vmul.f32 %v457, 0.999
    %v490 = vmul.f32 %v458, 0.999
    %v491 = vmul.f32 %v459, 0.999
    %v492 = vmul.f32 %v460, 0.999
    %v493 = vmul.f32 %v461, 0.999
    %v494 = vmul.f32 %v462, 0.999
    %v495 = vmul.f32 %v463, 0.999
    %v496 = vmul.f32 %v464, 0.999
    %v497 = vmul.f32 %v465, 0.999
    %v498 = vmul.f32 %v466, 0.999
    %v499 = vmul.f32 %v467, 0.999
    %v500 = vmul.f32 %v468, 0.999
    %v501 = vmul.f32 %v469, 0.999
    %v502 = vmul.f32 %v470, 0.999
    %v503 = vmul.f32 %v471, 0.999
    %v504 = vmul.f32 %v472, 0.999
    %v505 = vmul.f32 %v473, 0.999
    %v506 = vmul.f32 %v474, 0.999
    %v507 = vmul.f32 %v475, 0.999
    %v508 = vmul.f32 %v476, 0.999
    %v509 = vmul.f32 %v477, 0.999
    %v510 = vld [vmem:[%s5] sm:$0xff]
    %v511 = vld [vmem:[%s5 + $0x8] sm:$0xff]
    %v512 = vld [vmem:[%s5 + $0x10] sm:$0xff]
    %v513 = vld [vmem:[%s5 + $0x18] sm:$0xff]
    %v514 = vld [vmem:[%s5 + $0x20] sm:$0xff]
    %v515 = vld [vmem:[%s5 + $0x28] sm:$0xff]
    %v516 = vld [vmem:[%s5 + $0x30] sm:$0xff]
    %v517 = vld [vmem:[%s5 + $0x38] sm:$0xff]
    %v518 = vld [vmem:[%s5 + $0x40] sm:$0xff]
    %v519 = vld [vmem:[%s5 + $0x48] sm:$0xff]
    %v520 = vld [vmem:[%s5 + $0x50] sm:$0xff]
    %v521 = vld [vmem:[%s5 + $0x58] sm:$0xff]
    %v522 = vld [vmem:[%s5 + $0x60] sm:$0xff]
    %v523 = vld [vmem:[%s5 + $0x68] sm:$0xff]
    %v524 = vld [vmem:[%s5 + $0x70] sm:$0xff]
    %v525 = vld [vmem:[%s5 + $0x78] sm:$0xff]
    %v526 = vld [vmem:[%s5 + $0x80] sm:$0xff]
    %v527 = vld [vmem:[%s5 + $0x88] sm:$0xff]
    %v528 = vld [vmem:[%s5 + $0x90] sm:$0xff]
    %v529 = vld [vmem:[%s5 + $0x98] sm:$0xff]
    %v530 = vld [vmem:[%s5 + $0xa0] sm:$0xff]
    %v531 = vld [vmem:[%s5 + $0xa8] sm:$0xff]
    %v532 = vld [vmem:[%s5 + $0xb0] sm:$0xff]
    %v533 = vld [vmem:[%s5 + $0xb8] sm:$0xff]
    %v534 = vld [vmem:[%s5 + $0xc0] sm:$0xff]
    %v535 = vld [vmem:[%s5 + $0xc8] sm:$0xff]
    %v536 = vld [vmem:[%s5 + $0xd0] sm:$0xff]
    %v537 = vld [vmem:[%s5 + $0xd8] sm:$0xff]
    %v538 = vld [vmem:[%s5 + $0xe0] sm:$0xff]
    %v539 = vld [vmem:[%s5 + $0xe8] sm:$0xff]
    %v540 = vld [vmem:[%s5 + $0xf0] sm:$0xff]
    %v541 = vld [vmem:[%s5 + $0xf8] sm:$0xff]
    %v542 = vmul.f32 %v510, 0.001
    %v543 = vmul.f32 %v511, 0.001
    %v544 = vmul.f32 %v512, 0.001
    %v545 = vmul.f32 %v513, 0.001
    %v546 = vmul.f32 %v514, 0.001
    %v547 = vmul.f32 %v515, 0.001
    %v548 = vmul.f32 %v516, 0.001
    %v549 = vmul.f32 %v517, 0.001
    %v550 = vmul.f32 %v518, 0.001
    %v551 = vmul.f32 %v519, 0.001
    %v552 = vmul.f32 %v520, 0.001
    %v553 = vmul.f32 %v521, 0.001
    %v554 = vmul.f32 %v522, 0.001
    %v555 = vmul.f32 %v523, 0.001
    %v556 = vmul.f32 %v524, 0.001
    %v557 = vmul.f32 %v525, 0.001
    %v558 = vmul.f32 %v526, 0.001
    %v559 = vmul.f32 %v527, 0.001
    %v560 = vmul.f32 %v528, 0.001
    %v561 = vmul.f32 %v529, 0.001
    %v562 = vmul.f32 %v530, 0.001
    %v563 = vmul.f32 %v531, 0.001
    %v564 = vmul.f32 %v532, 0.001
    %v565 = vmul.f32 %v533, 0.001
    %v566 = vmul.f32 %v534, 0.001
    %v567 = vmul.f32 %v535, 0.001
    %v568 = vmul.f32 %v536, 0.001
    %v569 = vmul.f32 %v537, 0.001
    %v570 = vmul.f32 %v538, 0.001
    %v571 = vmul.f32 %v539, 0.001
    %v572 = vmul.f32 %v540, 0.001
    %v573 = vmul.f32 %v541, 0.001
    %v574 = vadd.f32 %v478, %v542
    %v575 = vadd.f32 %v479, %v543
    %v576 = vadd.f32 %v480, %v544
    %v577 = vadd.f32 %v481, %v545
    %v578 = vadd.f32 %v482, %v546
    %v579 = vadd.f32 %v483, %v547
    %v580 = vadd.f32 %v484, %v548
    %v581 = vadd.f32 %v485, %v549
    %v582 = vadd.f32 %v486, %v550
    %v583 = vadd.f32 %v487, %v551
    %v584 = vadd.f32 %v488, %v552
    %v585 = vadd.f32 %v489, %v553
    %v586 = vadd.f32 %v490, %v554
    %v587 = vadd.f32 %v491, %v555
    %v588 = vadd.f32 %v492, %v556
    %v589 = vadd.f32 %v493, %v557
    %v590 = vadd.f32 %v494, %v558
    %v591 = vadd.f32 %v495, %v559
    %v592 = vadd.f32 %v496, %v560
    %v593 = vadd.f32 %v497, %v561
    %v594 = vadd.f32 %v498, %v562
    %v595 = vadd.f32 %v499, %v563
    %v596 = vadd.f32 %v500, %v564
    %v597 = vadd.f32 %v501, %v565
    %v598 = vadd.f32 %v502, %v566
    %v599 = vadd.f32 %v503, %v567
    %v600 = vadd.f32 %v504, %v568
    %v601 = vadd.f32 %v505, %v569
    %v602 = vadd.f32 %v506, %v570
    %v603 = vadd.f32 %v507, %v571
    %v604 = vadd.f32 %v508, %v572
    %v605 = vadd.f32 %v509, %v573
    %v606 = vld [vmem:[%s10] sm:$0x1]
    %v607 = vmul.f32 %v606, 0.999
    %v608 = vld [vmem:[%s6] sm:$0x1]
    %v609 = vmul.f32 %v608, 0.001
    %v610 = vadd.f32 %v607, %v609
    %611 = vst [vmem:[%s13] sm:$0xff] %v377
    %612 = vst [vmem:[%s13 + $0x8] sm:$0xff] %v378
    %613 = vst [vmem:[%s13 + $0x10] sm:$0xff] %v379
    %614 = vst [vmem:[%s13 + $0x18] sm:$0xff] %v380
    %615 = vst [vmem:[%s13 + $0x20] sm:$0xff] %v381
    %616 = vst [vmem:[%s13 + $0x28] sm:$0xff] %v382
    %617 = vst [vmem:[%s13 + $0x30] sm:$0xff] %v383
    %618 = vst [vmem:[%s13 + $0x38] sm:$0xff] %v384
    %619 = vst [vmem:[%s13 + $0x40] sm:$0xff] %v385
    %620 = vst [vmem:[%s13 + $0x48] sm:$0xff] %v386
    %621 = vst [vmem:[%s13 + $0x50] sm:$0xff] %v387
    %622 = vst [vmem:[%s13 + $0x58] sm:$0xff] %v388
    %623 = vst [vmem:[%s13 + $0x60] sm:$0xff] %v389
    %624 = vst [vmem:[%s13 + $0x68] sm:$0xff] %v390
    %625 = vst [vmem:[%s13 + $0x70] sm:$0xff] %v391
    %626 = vst [vmem:[%s13 + $0x78] sm:$0xff] %v392
    %627 = vst [vmem:[%s13 + $0x80] sm:$0xff] %v393
    %628 = vst [vmem:[%s13 + $0x88] sm:$0xff] %v394
    %629 = vst [vmem:[%s13 + $0x90] sm:$0xff] %v395
    %630 = vst [vmem:[%s13 + $0x98] sm:$0xff] %v396
    %631 = vst [vmem:[%s13 + $0xa0] sm:$0xff] %v397
    %632 = vst [vmem:[%s13 + $0xa8] sm:$0xff] %v398
    %633 = vst [vmem:[%s13 + $0xb0] sm:$0xff] %v399
    %634 = vst [vmem:[%s13 + $0xb8] sm:$0xff] %v400
    %635 = vst [vmem:[%s13 + $0xc0] sm:$0xff] %v401
    %636 = vst [vmem:[%s13 + $0xc8] sm:$0xff] %v402
    %637 = vst [vmem:[%s13 + $0xd0] sm:$0xff] %v403
    %638 = vst [vmem:[%s13 + $0xd8] sm:$0xff] %v404
    %639 = vst [vmem:[%s13 + $0xe0] sm:$0xff] %v405
    %640 = vst [vmem:[%s13 + $0xe8] sm:$0xff] %v406
    %641 = vst [vmem:[%s13 + $0xf0] sm:$0xff] %v407
    %642 = vst [vmem:[%s13 + $0xf8] sm:$0xff] %v408
    %643 = vst [vmem:[%s13 + $0x100] sm:$0xff] %v409
    %644 = vst [vmem:[%s13 + $0x108] sm:$0xff] %v410
    %645 = vst [vmem:[%s13 + $0x110] sm:$0xff] %v411
    %646 = vst [vmem:[%s13 + $0x118] sm:$0xff] %v412
    %647 = vst [vmem:[%s13 + $0x120] sm:$0xff] %v413
    %648 = vst [vmem:[%s13 + $0x128] sm:$0xff] %v414
    %649 = vst [vmem:[%s13 + $0x130] sm:$0xff] %v415
    %650 = vst [vmem:[%s13 + $0x138] sm:$0xff] %v416
    %651 = vst [vmem:[%s13 + $0x140] sm:$0xff] %v417
    %652 = vst [vmem:[%s13 + $0x148] sm:$0xff] %v418
    %653 = vst [vmem:[%s13 + $0x150] sm:$0xff] %v419
    %654 = vst [vmem:[%s13 + $0x158] sm:$0xff] %v420
    %655 = vst [vmem:[%s13 + $0x160] sm:$0xff] %v421
    %656 = vst [vmem:[%s13 + $0x168] sm:$0xff] %v422
    %657 = vst [vmem:[%s13 + $0x170] sm:$0xff] %v423
    %658 = vst [vmem:[%s13 + $0x178] sm:$0xff] %v424
    %659 = vst [vmem:[%s13 + $0x180] sm:$0xff] %v425
    %660 = vst [vmem:[%s13 + $0x188] sm:$0xff] %v426
    %661 = vst [vmem:[%s13 + $0x190] sm:$0xff] %v427
    %662 = vst [vmem:[%s13 + $0x198] sm:$0xff] %v428
    %663 = vst [vmem:[%s13 + $0x1a0] sm:$0xff] %v429
    %664 = vst [vmem:[%s13 + $0x1a8] sm:$0xff] %v430
    %665 = vst [vmem:[%s13 + $0x1b0] sm:$0xff] %v431
    %666 = vst [vmem:[%s13 + $0x1b8] sm:$0xff] %v432
    %667 = vst [vmem:[%s13 + $0x1c0] sm:$0xff] %v433
    %668 = vst [vmem:[%s13 + $0x1c8] sm:$0xff] %v434
    %669 = vst [vmem:[%s13 + $0x1d0] sm:$0xff] %v435
    %670 = vst [vmem:[%s13 + $0x1d8] sm:$0xff] %v436
    %671 = vst [vmem:[%s13 + $0x1e0] sm:$0xff] %v437
    %672 = vst [vmem:[%s13 + $0x1e8] sm:$0xff] %v438
    %673 = vst [vmem:[%s13 + $0x1f0] sm:$0xff] %v439
    %674 = vst [vmem:[%s13 + $0x1f8] sm:$0xff] %v440
    %v675 = vlaneseq
    %vm676 = vcmp.ge.s32.totalorder %v675, 0
    %vm677 = vcmp.lt.s32.totalorder %v675, 256
    %vm678 = vmand %vm676, %vm677
    %679 = vst.msk [vmem:[%s14] sm:$0x3] %vm678, %v445
    %680 = vst [vmem:[%s15] sm:$0xff] %v574
    %681 = vst [vmem:[%s15 + $0x8] sm:$0xff] %v575
    %682 = vst [vmem:[%s15 + $0x10] sm:$0xff] %v576
    %683 = vst [vmem:[%s15 + $0x18] sm:$0xff] %v577
    %684 = vst [vmem:[%s15 + $0x20] sm:$0xff] %v578
    %685 = vst [vmem:[%s15 + $0x28] sm:$0xff] %v579
    %686 = vst [vmem:[%s15 + $0x30] sm:$0xff] %v580
    %687 = vst [vmem:[%s15 + $0x38] sm:$0xff] %v581
    %688 = vst [vmem:[%s15 + $0x40] sm:$0xff] %v582
    %689 = vst [vmem:[%s15 + $0x48] sm:$0xff] %v583
    %690 = vst [vmem:[%s15 + $0x50] sm:$0xff] %v584
    %691 = vst [vmem:[%s15 + $0x58] sm:$0xff] %v585
    %692 = vst [vmem:[%s15 + $0x60] sm:$0xff] %v586
    %693 = vst [vmem:[%s15 + $0x68] sm:$0xff] %v587
    %694 = vst [vmem:[%s15 + $0x70] sm:$0xff] %v588
    %695 = vst [vmem:[%s15 + $0x78] sm:$0xff] %v589
    %696 = vst [vmem:[%s15 + $0x80] sm:$0xff] %v590
    %697 = vst [vmem:[%s15 + $0x88] sm:$0xff] %v591
    %698 = vst [vmem:[%s15 + $0x90] sm:$0xff] %v592
    %699 = vst [vmem:[%s15 + $0x98] sm:$0xff] %v593
    %700 = vst [vmem:[%s15 + $0xa0] sm:$0xff] %v594
    %701 = vst [vmem:[%s15 + $0xa8] sm:$0xff] %v595
    %702 = vst [vmem:[%s15 + $0xb0] sm:$0xff] %v596
    %703 = vst [vmem:[%s15 + $0xb8] sm:$0xff] %v597
    %704 = vst [vmem:[%s15 + $0xc0] sm:$0xff] %v598
    %705 = vst [vmem:[%s15 + $0xc8] sm:$0xff] %v599
    %706 = vst [vmem:[%s15 + $0xd0] sm:$0xff] %v600
    %707 = vst [vmem:[%s15 + $0xd8] sm:$0xff] %v601
    %708 = vst [vmem:[%s15 + $0xe0] sm:$0xff] %v602
    %709 = vst [vmem:[%s15 + $0xe8] sm:$0xff] %v603
    %710 = vst [vmem:[%s15 + $0xf0] sm:$0xff] %v604
    %711 = vst [vmem:[%s15 + $0xf8] sm:$0xff] %v605
    %712 = vst [vmem:[%s16] sm:$0x1] %v610
    %v713 = vld [vmem:[%s1] sm:$0xff]
    %v714 = vunpack.c.l.bf16 %v713
    %v715 = vunpack.c.h.bf16 %v713
    %v716 = vld [vmem:[%s2] sm:$0xff]
    %v717 = vunpack.c.l.bf16 %v716
    %v718 = vunpack.c.h.bf16 %v716
    %v719 = vpack.c.bf16 %v717, %v714
    %v720 = vpack.c.bf16 %v718, %v715
    %v721 = vld [vmem:[%s3] sm:$0xff]
    %v722 = vld [vmem:[%s3 + $0x8] sm:$0xff]
    %v723 = vld [vmem:[%s3 + $0x10] sm:$0xff]
    %v724 = vld [vmem:[%s3 + $0x18] sm:$0xff]
    %v725 = vld [vmem:[%s3 + $0x20] sm:$0xff]
    %v726 = vld [vmem:[%s3 + $0x28] sm:$0xff]
    %v727 = vld [vmem:[%s3 + $0x30] sm:$0xff]
    %v728 = vld [vmem:[%s3 + $0x38] sm:$0xff]
    %v729 = vld [vmem:[%s3 + $0x40] sm:$0xff]
    %v730 = vld [vmem:[%s3 + $0x48] sm:$0xff]
    %v731 = vld [vmem:[%s3 + $0x50] sm:$0xff]
    %v732 = vld [vmem:[%s3 + $0x58] sm:$0xff]
    %v733 = vld [vmem:[%s3 + $0x60] sm:$0xff]
    %v734 = vld [vmem:[%s3 + $0x68] sm:$0xff]
    %v735 = vld [vmem:[%s3 + $0x70] sm:$0xff]
    %v736 = vld [vmem:[%s3 + $0x78] sm:$0xff]
    %v737 = vld [vmem:[%s3 + $0x80] sm:$0xff]
    %v738 = vld [vmem:[%s3 + $0x88] sm:$0xff]
    %v739 = vld [vmem:[%s3 + $0x90] sm:$0xff]
    %v740 = vld [vmem:[%s3 + $0x98] sm:$0xff]
    %v741 = vld [vmem:[%s3 + $0xa0] sm:$0xff]
    %v742 = vld [vmem:[%s3 + $0xa8] sm:$0xff]
    %v743 = vld [vmem:[%s3 + $0xb0] sm:$0xff]
    %v744 = vld [vmem:[%s3 + $0xb8] sm:$0xff]
    %v745 = vld [vmem:[%s3 + $0xc0] sm:$0xff]
    %v746 = vld [vmem:[%s3 + $0xc8] sm:$0xff]
    %v747 = vld [vmem:[%s3 + $0xd0] sm:$0xff]
    %v748 = vld [vmem:[%s3 + $0xd8] sm:$0xff]
    %v749 = vld [vmem:[%s3 + $0xe0] sm:$0xff]
    %v750 = vld [vmem:[%s3 + $0xe8] sm:$0xff]
    %v751 = vld [vmem:[%s3 + $0xf0] sm:$0xff]
    %v752 = vld [vmem:[%s3 + $0xf8] sm:$0xff]
    %v753 = vld [vmem:[%s3 + $0x100] sm:$0xff]
    %v754 = vld [vmem:[%s3 + $0x108] sm:$0xff]
    %v755 = vld [vmem:[%s3 + $0x110] sm:$0xff]
    %v756 = vld [vmem:[%s3 + $0x118] sm:$0xff]
    %v757 = vld [vmem:[%s3 + $0x120] sm:$0xff]
    %v758 = vld [vmem:[%s3 + $0x128] sm:$0xff]
    %v759 = vld [vmem:[%s3 + $0x130] sm:$0xff]
    %v760 = vld [vmem:[%s3 + $0x138] sm:$0xff]
    %v761 = vld [vmem:[%s3 + $0x140] sm:$0xff]
    %v762 = vld [vmem:[%s3 + $0x148] sm:$0xff]
    %v763 = vld [vmem:[%s3 + $0x150] sm:$0xff]
    %v764 = vld [vmem:[%s3 + $0x158] sm:$0xff]
    %v765 = vld [vmem:[%s3 + $0x160] sm:$0xff]
    %v766 = vld [vmem:[%s3 + $0x168] sm:$0xff]
    %v767 = vld [vmem:[%s3 + $0x170] sm:$0xff]
    %v768 = vld [vmem:[%s3 + $0x178] sm:$0xff]
    %v769 = vld [vmem:[%s3 + $0x180] sm:$0xff]
    %v770 = vld [vmem:[%s3 + $0x188] sm:$0xff]
    %v771 = vld [vmem:[%s3 + $0x190] sm:$0xff]
    %v772 = vld [vmem:[%s3 + $0x198] sm:$0xff]
    %v773 = vld [vmem:[%s3 + $0x1a0] sm:$0xff]
    %v774 = vld [vmem:[%s3 + $0x1a8] sm:$0xff]
    %v775 = vld [vmem:[%s3 + $0x1b0] sm:$0xff]
    %v776 = vld [vmem:[%s3 + $0x1b8] sm:$0xff]
    %v777 = vld [vmem:[%s3 + $0x1c0] sm:$0xff]
    %v778 = vld [vmem:[%s3 + $0x1c8] sm:$0xff]
    %v779 = vld [vmem:[%s3 + $0x1d0] sm:$0xff]
    %v780 = vld [vmem:[%s3 + $0x1d8] sm:$0xff]
    %v781 = vld [vmem:[%s3 + $0x1e0] sm:$0xff]
    %v782 = vld [vmem:[%s3 + $0x1e8] sm:$0xff]
    %v783 = vld [vmem:[%s3 + $0x1f0] sm:$0xff]
    %v784 = vld [vmem:[%s3 + $0x1f8] sm:$0xff]
    %v785 = vpack.c.bf16 %v723, %v721
    %v786 = vpack.c.bf16 %v724, %v722
    %v787 = vpack.c.bf16 %v379, %v377
    %v788 = vpack.c.bf16 %v380, %v378
    %v789 = vpack.c.bf16 %v727, %v725
    %v790 = vpack.c.bf16 %v728, %v726
    %v791 = vpack.c.bf16 %v383, %v381
    %v792 = vpack.c.bf16 %v384, %v382
    %v793 = vpack.c.bf16 %v731, %v729
    %v794 = vpack.c.bf16 %v732, %v730
    %v795 = vpack.c.bf16 %v387, %v385
    %v796 = vpack.c.bf16 %v388, %v386
    %v797 = vpack.c.bf16 %v735, %v733
    %v798 = vpack.c.bf16 %v736, %v734
    %v799 = vpack.c.bf16 %v391, %v389
    %v800 = vpack.c.bf16 %v392, %v390
    %v801 = vpack.c.bf16 %v739, %v737
    %v802 = vpack.c.bf16 %v740, %v738
    %v803 = vpack.c.bf16 %v395, %v393
    %v804 = vpack.c.bf16 %v396, %v394
    %v805 = vpack.c.bf16 %v743, %v741
    %v806 = vpack.c.bf16 %v744, %v742
    %v807 = vpack.c.bf16 %v399, %v397
    %v808 = vpack.c.bf16 %v400, %v398
    %v809 = vpack.c.bf16 %v747, %v745
    %v810 = vpack.c.bf16 %v748, %v746
    %v811 = vpack.c.bf16 %v403, %v401
    %v812 = vpack.c.bf16 %v404, %v402
    %v813 = vpack.c.bf16 %v751, %v749
    %v814 = vpack.c.bf16 %v752, %v750
    %v815 = vpack.c.bf16 %v407, %v405
    %v816 = vpack.c.bf16 %v408, %v406
    %v817 = vpack.c.bf16 %v755, %v753
    %v818 = vpack.c.bf16 %v756, %v754
    %v819 = vpack.c.bf16 %v411, %v409
    %v820 = vpack.c.bf16 %v412, %v410
    %v821 = vpack.c.bf16 %v759, %v757
    %v822 = vpack.c.bf16 %v760, %v758
    %v823 = vpack.c.bf16 %v415, %v413
    %v824 = vpack.c.bf16 %v416, %v414
    %v825 = vpack.c.bf16 %v763, %v761
    %v826 = vpack.c.bf16 %v764, %v762
    %v827 = vpack.c.bf16 %v419, %v417
    %v828 = vpack.c.bf16 %v420, %v418
    %v829 = vpack.c.bf16 %v767, %v765
    %v830 = vpack.c.bf16 %v768, %v766
    %v831 = vpack.c.bf16 %v423, %v421
    %v832 = vpack.c.bf16 %v424, %v422
    %v833 = vpack.c.bf16 %v771, %v769
    %v834 = vpack.c.bf16 %v772, %v770
    %v835 = vpack.c.bf16 %v427, %v425
    %v836 = vpack.c.bf16 %v428, %v426
    %v837 = vpack.c.bf16 %v775, %v773
    %v838 = vpack.c.bf16 %v776, %v774
    %v839 = vpack.c.bf16 %v431, %v429
    %v840 = vpack.c.bf16 %v432, %v430
    %v841 = vpack.c.bf16 %v779, %v777
    %v842 = vpack.c.bf16 %v780, %v778
    %v843 = vpack.c.bf16 %v435, %v433
    %v844 = vpack.c.bf16 %v436, %v434
    %v845 = vpack.c.bf16 %v783, %v781
    %v846 = vpack.c.bf16 %v784, %v782
    %v847 = vpack.c.bf16 %v439, %v437
    %v848 = vpack.c.bf16 %v440, %v438
    %849 = vmatprep.subr.bf16.mxu0 %v786
    %850 = vmatpush1.bf16.msra.mxu0 %v785
    %851 = vmatprep.subr.bf16.mxu0 %v790
    %852 = vmatpush1.bf16.msra.mxu0 %v789
    %853 = vmatprep.subr.bf16.mxu0 %v794
    %854 = vmatpush1.bf16.msra.mxu0 %v793
    %855 = vmatprep.subr.bf16.mxu0 %v798
    %856 = vmatpush1.bf16.msra.mxu0 %v797
    %857 = vmatprep.subr.bf16.mxu0 %v802
    %858 = vmatpush1.bf16.msra.mxu0 %v801
    %859 = vmatprep.subr.bf16.mxu0 %v806
    %860 = vmatpush1.bf16.msra.mxu0 %v805
    %861 = vmatprep.subr.bf16.mxu0 %v810
    %862 = vmatpush1.bf16.msra.mxu0 %v809
    %863 = vmatprep.subr.bf16.mxu0 %v814
    %864 = vmatpush1.bf16.msra.mxu0 %v813
    %865 = vmatprep.subr.bf16.mxu0 %v818
    %866 = vmatpush1.bf16.msra.mxu0 %v817
    %867 = vmatprep.subr.bf16.mxu0 %v822
    %868 = vmatpush1.bf16.msra.mxu0 %v821
    %869 = vmatprep.subr.bf16.mxu0 %v826
    %870 = vmatpush1.bf16.msra.mxu0 %v825
    %871 = vmatprep.subr.bf16.mxu0 %v830
    %872 = vmatpush1.bf16.msra.mxu0 %v829
    %873 = vmatprep.subr.bf16.mxu0 %v834
    %874 = vmatpush1.bf16.msra.mxu0 %v833
    %875 = vmatprep.subr.bf16.mxu0 %v838
    %876 = vmatpush1.bf16.msra.mxu0 %v837
    %877 = vmatprep.subr.bf16.mxu0 %v842
    %878 = vmatpush1.bf16.msra.mxu0 %v841
    %879 = vmatprep.subr.bf16.mxu0 %v846
    %880 = vmatpush1.bf16.msra.mxu0 %v845
    %881 = vmatprep.mubr.bf16.mxu0 %v720
    %882 = vmatmul.mubr.bf16.gmra.mrb[0].mxu0 %v719
    %v883 = vpop.f32.mrb[0].mxu0
    %v884 = vadd.f32 0.0, %v883
    %v885 = vpop.f32.mrb[0].mxu0
    %v886 = vadd.f32 0.0, %v885
    %v887 = vpop.f32.mrb[0].mxu0
    %v888 = vadd.f32 0.0, %v887
    %v889 = vpop.f32.mrb[0].mxu0
    %v890 = vadd.f32 0.0, %v889
    %891 = vdwg.mxu0
    %892 = vmatprep.subr.bf16.mxu0 %v788
    %893 = vmatpush1.bf16.msra.mxu0 %v787
    %894 = vmatprep.subr.bf16.mxu0 %v792
    %895 = vmatpush1.bf16.msra.mxu0 %v791
    %896 = vmatprep.subr.bf16.mxu0 %v796
    %897 = vmatpush1.bf16.msra.mxu0 %v795
    %898 = vmatprep.subr.bf16.mxu0 %v800
    %899 = vmatpush1.bf16.msra.mxu0 %v799
    %900 = vmatprep.subr.bf16.mxu0 %v804
    %901 = vmatpush1.bf16.msra.mxu0 %v803
    %902 = vmatprep.subr.bf16.mxu0 %v808
    %903 = vmatpush1.bf16.msra.mxu0 %v807
    %904 = vmatprep.subr.bf16.mxu0 %v812
    %905 = vmatpush1.bf16.msra.mxu0 %v811
    %906 = vmatprep.subr.bf16.mxu0 %v816
    %907 = vmatpush1.bf16.msra.mxu0 %v815
    %908 = vmatprep.subr.bf16.mxu0 %v820
    %909 = vmatpush1.bf16.msra.mxu0 %v819
    %910 = vmatprep.subr.bf16.mxu0 %v824
    %911 = vmatpush1.bf16.msra.mxu0 %v823
    %912 = vmatprep.subr.bf16.mxu0 %v828
    %913 = vmatpush1.bf16.msra.mxu0 %v827
    %914 = vmatprep.subr.bf16.mxu0 %v832
    %915 = vmatpush1.bf16.msra.mxu0 %v831
    %916 = vmatprep.subr.bf16.mxu0 %v836
    %917 = vmatpush1.bf16.msra.mxu0 %v835
    %918 = vmatprep.subr.bf16.mxu0 %v840
    %919 = vmatpush1.bf16.msra.mxu0 %v839
    %920 = vmatprep.subr.bf16.mxu0 %v844
    %921 = vmatpush1.bf16.msra.mxu0 %v843
    %922 = vmatprep.subr.bf16.mxu0 %v848
    %923 = vmatpush1.bf16.msra.mxu0 %v847
    %924 = vmatprep.mubr.bf16.mxu0 %v720
    %925 = vmatmul.mubr.bf16.gmra.mrb[0].mxu0 %v719
    %v926 = vpop.f32.mrb[0].mxu0
    %v927 = vadd.f32 0.0, %v926
    %v928 = vpop.f32.mrb[0].mxu0
    %v929 = vadd.f32 0.0, %v928
    %v930 = vpop.f32.mrb[0].mxu0
    %v931 = vadd.f32 0.0, %v930
    %v932 = vpop.f32.mrb[0].mxu0
    %v933 = vadd.f32 0.0, %v932
    %934 = vdwg.mxu0
    %v935 = vld [vmem:[%s4] sm:$0x3]
    %v937 = vlaneseq
    %v938 = vshrl.u32 %v937, 7
    %v939 = vsub.s32 0, %v938
    %v940 = vrot.slane %v935, %v939
    %v941 = vlaneseq
    %v942 = vshrl.u32 %v941, 7
    %v943 = vsub.s32 1, %v942
    %v944 = vrot.slane %v935, %v943
    %v947 = vadd.f32 %v884, %v940
    %v948 = vadd.f32 %v886, %v944
    %v949 = vadd.f32 %v888, %v940
    %v950 = vadd.f32 %v890, %v944
    %v951 = vmax.f32 %v947, 0.0
    %v952 = vmax.f32 %v948, 0.0
    %v953 = vmax.f32 %v949, 0.0
    %v954 = vmax.f32 %v950, 0.0
    %v956 = vlaneseq
    %v957 = vshrl.u32 %v956, 7
    %v958 = vsub.s32 0, %v957
    %v959 = vrot.slane %v445, %v958
    %v960 = vlaneseq
    %v961 = vshrl.u32 %v960, 7
    %v962 = vsub.s32 1, %v961
    %v963 = vrot.slane %v445, %v962
    %v966 = vadd.f32 %v927, %v959
    %v967 = vadd.f32 %v929, %v963
    %v968 = vadd.f32 %v931, %v959
    %v969 = vadd.f32 %v933, %v963
    %v970 = vmax.f32 %v966, 0.0
    %v971 = vmax.f32 %v967, 0.0
    %v972 = vmax.f32 %v968, 0.0
    %v973 = vmax.f32 %v969, 0.0
    %v974 = vld [vmem:[%s5] sm:$0xff]
    %v975 = vld [vmem:[%s5 + $0x8] sm:$0xff]
    %v976 = vld [vmem:[%s5 + $0x10] sm:$0xff]
    %v977 = vld [vmem:[%s5 + $0x18] sm:$0xff]
    %v978 = vld [vmem:[%s5 + $0x20] sm:$0xff]
    %v979 = vld [vmem:[%s5 + $0x28] sm:$0xff]
    %v980 = vld [vmem:[%s5 + $0x30] sm:$0xff]
    %v981 = vld [vmem:[%s5 + $0x38] sm:$0xff]
    %v982 = vld [vmem:[%s5 + $0x40] sm:$0xff]
    %v983 = vld [vmem:[%s5 + $0x48] sm:$0xff]
    %v984 = vld [vmem:[%s5 + $0x50] sm:$0xff]
    %v985 = vld [vmem:[%s5 + $0x58] sm:$0xff]
    %v986 = vld [vmem:[%s5 + $0x60] sm:$0xff]
    %v987 = vld [vmem:[%s5 + $0x68] sm:$0xff]
    %v988 = vld [vmem:[%s5 + $0x70] sm:$0xff]
    %v989 = vld [vmem:[%s5 + $0x78] sm:$0xff]
    %v990 = vld [vmem:[%s5 + $0x80] sm:$0xff]
    %v991 = vld [vmem:[%s5 + $0x88] sm:$0xff]
    %v992 = vld [vmem:[%s5 + $0x90] sm:$0xff]
    %v993 = vld [vmem:[%s5 + $0x98] sm:$0xff]
    %v994 = vld [vmem:[%s5 + $0xa0] sm:$0xff]
    %v995 = vld [vmem:[%s5 + $0xa8] sm:$0xff]
    %v996 = vld [vmem:[%s5 + $0xb0] sm:$0xff]
    %v997 = vld [vmem:[%s5 + $0xb8] sm:$0xff]
    %v998 = vld [vmem:[%s5 + $0xc0] sm:$0xff]
    %v999 = vld [vmem:[%s5 + $0xc8] sm:$0xff]
    %v1000 = vld [vmem:[%s5 + $0xd0] sm:$0xff]
    %v1001 = vld [vmem:[%s5 + $0xd8] sm:$0xff]
    %v1002 = vld [vmem:[%s5 + $0xe0] sm:$0xff]
    %v1003 = vld [vmem:[%s5 + $0xe8] sm:$0xff]
    %v1004 = vld [vmem:[%s5 + $0xf0] sm:$0xff]
    %v1005 = vld [vmem:[%s5 + $0xf8] sm:$0xff]
    %v1006 = vld [vmem:[%s6] sm:$0x1]
    %v1007 = vpack.c.bf16 %v953, %v951
    %v1008 = vpack.c.bf16 %v954, %v952
    %v1009 = vpack.c.bf16 %v975, %v974
    %v1010 = vpack.c.bf16 %v977, %v976
    %v1011 = vpack.c.bf16 %v979, %v978
    %v1012 = vpack.c.bf16 %v981, %v980
    %v1013 = vpack.c.bf16 %v983, %v982
    %v1014 = vpack.c.bf16 %v985, %v984
    %v1015 = vpack.c.bf16 %v987, %v986
    %v1016 = vpack.c.bf16 %v989, %v988
    %v1017 = vpack.c.bf16 %v991, %v990
    %v1018 = vpack.c.bf16 %v993, %v992
    %v1019 = vpack.c.bf16 %v995, %v994
    %v1020 = vpack.c.bf16 %v997, %v996
    %v1021 = vpack.c.bf16 %v999, %v998
    %v1022 = vpack.c.bf16 %v1001, %v1000
    %v1023 = vpack.c.bf16 %v1003, %v1002
    %v1024 = vpack.c.bf16 %v1005, %v1004
    %v1026 = vlaneseq
    %v1027 = vshrl.u32 %v1026, 7
    %v1028 = vsub.s32 0, %v1027
    %v1029 = vrot.slane %v1006, %v1028
    %1031 = vmatprep.subr.bf16.mxu0 0
    %1032 = vmatpush1.bf16.msra.mxu0 %v1009
    %1033 = vmatprep.subr.bf16.mxu0 0
    %1034 = vmatpush1.bf16.msra.mxu0 %v1010
    %1035 = vmatprep.subr.bf16.mxu0 0
    %1036 = vmatpush1.bf16.msra.mxu0 %v1011
    %1037 = vmatprep.subr.bf16.mxu0 0
    %1038 = vmatpush1.bf16.msra.mxu0 %v1012
    %1039 = vmatprep.subr.bf16.mxu0 0
    %1040 = vmatpush1.bf16.msra.mxu0 %v1013
    %1041 = vmatprep.subr.bf16.mxu0 0
    %1042 = vmatpush1.bf16.msra.mxu0 %v1014
    %1043 = vmatprep.subr.bf16.mxu0 0
    %1044 = vmatpush1.bf16.msra.mxu0 %v1015
    %1045 = vmatprep.subr.bf16.mxu0 0
    %1046 = vmatpush1.bf16.msra.mxu0 %v1016
    %1047 = vmatprep.subr.bf16.mxu0 0
    %1048 = vmatpush1.bf16.msra.mxu0 %v1017
    %1049 = vmatprep.subr.bf16.mxu0 0
    %1050 = vmatpush1.bf16.msra.mxu0 %v1018
    %1051 = vmatprep.subr.bf16.mxu0 0
    %1052 = vmatpush1.bf16.msra.mxu0 %v1019
    %1053 = vmatprep.subr.bf16.mxu0 0
    %1054 = vmatpush1.bf16.msra.mxu0 %v1020
    %1055 = vmatprep.subr.bf16.mxu0 0
    %1056 = vmatpush1.bf16.msra.mxu0 %v1021
    %1057 = vmatprep.subr.bf16.mxu0 0
    %1058 = vmatpush1.bf16.msra.mxu0 %v1022
    %1059 = vmatprep.subr.bf16.mxu0 0
    %1060 = vmatpush1.bf16.msra.mxu0 %v1023
    %1061 = vmatprep.subr.bf16.mxu0 0
    %1062 = vmatpush1.bf16.msra.mxu0 %v1024
    %1063 = vmatprep.mubr.bf16.mxu0 %v1008
    %1064 = vmatmul.mubr.bf16.gmra.mrb[0].mxu0 %v1007
    %v1065 = vpop.f32.mrb[0].mxu0
    %v1066 = vadd.f32 %v1029, %v1065
    %v1067 = vpop.f32.mrb[0].mxu0
    %v1068 = vpop.f32.mrb[0].mxu0
    %v1069 = vadd.f32 %v1029, %v1068
    %v1070 = vpop.f32.mrb[0].mxu0
    %1071 = vdwg.mxu0
    %v1072 = vmul.f32 %v1066, %v1066
    %v1073 = vmul.f32 %v1069, %v1069
    %1074 = vadd.xlane.f32.xlu0 %v1072
    %v1075 = vpop.xlane.xlu0 %1074
    %1076 = vadd.xlane.f32.xlu0 %v1073
    %v1077 = vpop.xlane.xlu0 %1076
    %v1078 = vmax.f32 %v1075, 1e-24
    %v1079 = vmax.f32 %v1077, 1e-24
    %v1080 = vrsqrt.pop %v1078
    %v1081 = vrsqrt.pop %v1079
    %v1082 = vmul.f32 %v1066, %v1080
    %v1083 = vmul.f32 %v1069, %v1081
    %v1084 = vpack.c.bf16 %v972, %v970
    %v1085 = vpack.c.bf16 %v973, %v971
    %v1086 = vpack.c.bf16 %v575, %v574
    %v1087 = vpack.c.bf16 %v577, %v576
    %v1088 = vpack.c.bf16 %v579, %v578
    %v1089 = vpack.c.bf16 %v581, %v580
    %v1090 = vpack.c.bf16 %v583, %v582
    %v1091 = vpack.c.bf16 %v585, %v584
    %v1092 = vpack.c.bf16 %v587, %v586
    %v1093 = vpack.c.bf16 %v589, %v588
    %v1094 = vpack.c.bf16 %v591, %v590
    %v1095 = vpack.c.bf16 %v593, %v592
    %v1096 = vpack.c.bf16 %v595, %v594
    %v1097 = vpack.c.bf16 %v597, %v596
    %v1098 = vpack.c.bf16 %v599, %v598
    %v1099 = vpack.c.bf16 %v601, %v600
    %v1100 = vpack.c.bf16 %v603, %v602
    %v1101 = vpack.c.bf16 %v605, %v604
    %v1103 = vlaneseq
    %v1104 = vshrl.u32 %v1103, 7
    %v1105 = vsub.s32 0, %v1104
    %v1106 = vrot.slane %v610, %v1105
    %1108 = vmatprep.subr.bf16.mxu0 0
    %1109 = vmatpush1.bf16.msra.mxu0 %v1086
    %1110 = vmatprep.subr.bf16.mxu0 0
    %1111 = vmatpush1.bf16.msra.mxu0 %v1087
    %1112 = vmatprep.subr.bf16.mxu0 0
    %1113 = vmatpush1.bf16.msra.mxu0 %v1088
    %1114 = vmatprep.subr.bf16.mxu0 0
    %1115 = vmatpush1.bf16.msra.mxu0 %v1089
    %1116 = vmatprep.subr.bf16.mxu0 0
    %1117 = vmatpush1.bf16.msra.mxu0 %v1090
    %1118 = vmatprep.subr.bf16.mxu0 0
    %1119 = vmatpush1.bf16.msra.mxu0 %v1091
    %1120 = vmatprep.subr.bf16.mxu0 0
    %1121 = vmatpush1.bf16.msra.mxu0 %v1092
    %1122 = vmatprep.subr.bf16.mxu0 0
    %1123 = vmatpush1.bf16.msra.mxu0 %v1093
    %1124 = vmatprep.subr.bf16.mxu0 0
    %1125 = vmatpush1.bf16.msra.mxu0 %v1094
    %1126 = vmatprep.subr.bf16.mxu0 0
    %1127 = vmatpush1.bf16.msra.mxu0 %v1095
    %1128 = vmatprep.subr.bf16.mxu0 0
    %1129 = vmatpush1.bf16.msra.mxu0 %v1096
    %1130 = vmatprep.subr.bf16.mxu0 0
    %1131 = vmatpush1.bf16.msra.mxu0 %v1097
    %1132 = vmatprep.subr.bf16.mxu0 0
    %1133 = vmatpush1.bf16.msra.mxu0 %v1098
    %1134 = vmatprep.subr.bf16.mxu0 0
    %1135 = vmatpush1.bf16.msra.mxu0 %v1099
    %1136 = vmatprep.subr.bf16.mxu0 0
    %1137 = vmatpush1.bf16.msra.mxu0 %v1100
    %1138 = vmatprep.subr.bf16.mxu0 0
    %1139 = vmatpush1.bf16.msra.mxu0 %v1101
    %1140 = vmatprep.mubr.bf16.mxu0 %v1085
    %1141 = vmatmul.mubr.bf16.gmra.mrb[0].mxu0 %v1084
    %v1142 = vpop.f32.mrb[0].mxu0
    %v1143 = vadd.f32 %v1106, %v1142
    %v1144 = vpop.f32.mrb[0].mxu0
    %v1145 = vpop.f32.mrb[0].mxu0
    %v1146 = vadd.f32 %v1106, %v1145
    %v1147 = vpop.f32.mrb[0].mxu0
    %1148 = vdwg.mxu0
    %v1149 = vmul.f32 %v1143, %v1143
    %v1150 = vmul.f32 %v1146, %v1146
    %1151 = vadd.xlane.f32.xlu0 %v1149
    %v1152 = vpop.xlane.xlu0 %1151
    %1153 = vadd.xlane.f32.xlu0 %v1150
    %v1154 = vpop.xlane.xlu0 %1153
    %v1155 = vmax.f32 %v1152, 1e-24
    %v1156 = vmax.f32 %v1154, 1e-24
    %v1157 = vrsqrt.pop %v1155
    %v1158 = vrsqrt.pop %v1156
    %v1159 = vmul.f32 %v1143, %v1157
    %v1160 = vmul.f32 %v1146, %v1158
    %v1161 = vmul.f32 %v1082, 14.285714
    %v1162 = vmul.f32 %v1083, 14.285714
    %v1163 = vpack.c.bf16 %v1162, %v1161
    %v1164 = vmul.f32 %v1161, %v1160
    %v1165 = vmul.f32 %v1162, %v1159
    %1166 = vadd.xlane.f32.xlu0 %v1164
    %v1167 = vpop.xlane.xlu0 %1166
    %1168 = vadd.xlane.f32.xlu0 %v1165
    %v1169 = vpop.xlane.xlu0 %1168
    %vm1170 = vcmask 7168
    %1171 = vst.msk [vmem:[#allocation6] sm:$0xff] %vm1170, %v1167
    %1172 = vst.msk [vmem:[#allocation6 + $0x8] sm:$0xff] %vm1170, %v1169
    %1173 = vst.msk [vmem:[#allocation7] sm:$0xff] %vm1170, 1.0
    %1174 = vst.msk [vmem:[#allocation7 + $0x8] sm:$0xff] %vm1170, 1.0
    loop: start=0, step=1, limit=2
    $region80: #{moco_forward.1} parent=1 // loop_pre_header
      _
    $region81: #{moco_forward.1} parent=1 // loop_header
      %s1176 = sphi 0, %s1180
      %p1177 = scmp.ge.s32.totalorder %s1176, 2
    $region82: #{moco_forward.1} parent=1 // loop_header_branch
      %1179 = sbr.rel (%p1177) target = $region86
    $region83: #{moco_forward.1} parent=1 // loop_body
      %s1181 = sand.u32 %s1176, 1
      %s1182 = smul.u32 %s1181, 16
      %s1183 = smul.addr %s1182, 8
      %s1184 = scalar_lea.vmem [#allocation2], %s1183
      %s1185 = scalar_lea.sflag [#allocation3], %s1181
      %s1186 = smul.u32 4, 32
      %s1187 = smul.u32 %s1186, 1
      %s1188 = sshll.u32 %s1187, 4
      %1189 = dma.done %s1185, %s1188
      %s1190 = sadd.s32 %s1176, 1
      %p1191 = scmp.lt.s32.totalorder %s1190, 2
      // Predicated region
      $region87: #{moco_forward.1} parent=83 // pred_check
        %p1192 = pneg %p1191
      $region88: #{moco_forward.1} parent=83 // pred_check_branch
        %1194 = sbr.rel (%p1192) target = $region90
      $region89: #{moco_forward.1} parent=83 // pred_region
        %s1195 = ssub.s32 1, %s1181
        %s1196 = smul.u32 %s1190, 256
        %s1197 = sshra.s32 %s1196, 3
        %s1198 = sand.u32 %s1196, 7
        %s1199 = smul.addr %s1197, 4
        %s1200 = scalar_lea.vmem %s11, %s1199
        %s1201 = smul.u32 %s1195, 16
        %s1202 = smul.addr %s1201, 8
        %s1203 = scalar_lea.vmem [#allocation2], %s1202
        %s1204 = scalar_lea.sflag [#allocation3], %s1195
        %p1206 = scmp.lt.u32.totalorder 128, 8
        %p1207 = pneg %p1206
        // Predicated region
        $region91: #{moco_forward.1} parent=89 // pred_check
          _
        $region92: #{moco_forward.1} parent=89 // pred_check_branch
          %1209 = sbr.rel (%p1206) target = $region94
        $region93: #{moco_forward.1} parent=89 // pred_region
          %s1224 = sand.u32 128, 7
          %p1225 = scmp.eq.s32.totalorder %s1224, 0
          // Predicated region
          $region106: #{moco_forward.1} parent=93 // pred_check
            %p1226 = pneg %p1225
          $region107: #{moco_forward.1} parent=93 // pred_check_branch
            %1228 = sbr.rel (%p1226) target = $region109
          $region108: #{moco_forward.1} parent=93 // pred_region
            loop: start=0, step=1, limit=1
            $region110: #{moco_forward.1} parent=108 // loop_pre_header
              _
            $region111: #{moco_forward.1} parent=108 // loop_header
              %s1230 = sphi 0, %s1234
              %p1231 = scmp.ge.s32.totalorder %s1230, 1
              %s1235 = sphi %s1200, %s1200
              %s1236 = sphi %s1203, %s1203
            $region112: #{moco_forward.1} parent=108 // loop_header_branch
              %1233 = sbr.rel (%p1231) target = $region116
            $region113: #{moco_forward.1} parent=108 // loop_body
              %v1237 = vld [vmem:[%s1235] sm:$0xff]
              %1238 = vst [vmem:[%s1236] sm:$0xff] %v1237
              %v1239 = vld [vmem:[%s1235 + $0x8] sm:$0xff]
              %1240 = vst [vmem:[%s1236 + $0x8] sm:$0xff] %v1239
              %v1241 = vld [vmem:[%s1235 + $0x10] sm:$0xff]
              %1242 = vst [vmem:[%s1236 + $0x10] sm:$0xff] %v1241
              %v1243 = vld [vmem:[%s1235 + $0x18] sm:$0xff]
              %1244 = vst [vmem:[%s1236 + $0x18] sm:$0xff] %v1243
              %v1245 = vld [vmem:[%s1235 + $0x20] sm:$0xff]
              %1246 = vst [vmem:[%s1236 + $0x20] sm:$0xff] %v1245
              %v1247 = vld [vmem:[%s1235 + $0x28] sm:$0xff]
              %1248 = vst [vmem:[%s1236 + $0x28] sm:$0xff] %v1247
              %v1249 = vld [vmem:[%s1235 + $0x30] sm:$0xff]
              %1250 = vst [vmem:[%s1236 + $0x30] sm:$0xff] %v1249
              %v1251 = vld [vmem:[%s1235 + $0x38] sm:$0xff]
              %1252 = vst [vmem:[%s1236 + $0x38] sm:$0xff] %v1251
              %v1253 = vld [vmem:[%s1235 + $0x40] sm:$0xff]
              %1254 = vst [vmem:[%s1236 + $0x40] sm:$0xff] %v1253
              %v1255 = vld [vmem:[%s1235 + $0x48] sm:$0xff]
              %1256 = vst [vmem:[%s1236 + $0x48] sm:$0xff] %v1255
              %v1257 = vld [vmem:[%s1235 + $0x50] sm:$0xff]
              %1258 = vst [vmem:[%s1236 + $0x50] sm:$0xff] %v1257
              %v1259 = vld [vmem:[%s1235 + $0x58] sm:$0xff]
              %1260 = vst [vmem:[%s1236 + $0x58] sm:$0xff] %v1259
              %v1261 = vld [vmem:[%s1235 + $0x60] sm:$0xff]
              %1262 = vst [vmem:[%s1236 + $0x60] sm:$0xff] %v1261
              %v1263 = vld [vmem:[%s1235 + $0x68] sm:$0xff]
              %1264 = vst [vmem:[%s1236 + $0x68] sm:$0xff] %v1263
              %v1265 = vld [vmem:[%s1235 + $0x70] sm:$0xff]
              %1266 = vst [vmem:[%s1236 + $0x70] sm:$0xff] %v1265
              %v1267 = vld [vmem:[%s1235 + $0x78] sm:$0xff]
              %1268 = vst [vmem:[%s1236 + $0x78] sm:$0xff] %v1267
            $region114: #{moco_forward.1} parent=108 // loop_footer
              %s1234 = sadd.s32 1, %s1230
            $region115: #{moco_forward.1} parent=108 // loop_footer_branch
              %1229 = sbr.rel target = $region111
            $region116: #{moco_forward.1} parent=108 // loop_exit
              _
          $region109: #{moco_forward.1} parent=93 // pred_fallthru
            _
          %p1269 = pneg %p1225
          // Predicated region
          $region117: #{moco_forward.1} parent=93 // pred_check
            _
          $region118: #{moco_forward.1} parent=93 // pred_check_branch
            %1271 = sbr.rel (%p1225) target = $region120
          $region119: #{moco_forward.1} parent=93 // pred_region
            %s1272 = sand.u32 128, 7
          $region120: #{moco_forward.1} parent=93 // pred_fallthru
            _
        $region94: #{moco_forward.1} parent=89 // pred_fallthru
          _
        // Predicated region
        $region95: #{moco_forward.1} parent=89 // pred_check
          %p1210 = pneg %p1206
        $region96: #{moco_forward.1} parent=89 // pred_check_branch
          %1212 = sbr.rel (%p1210) target = $region98
        $region97: #{moco_forward.1} parent=89 // pred_region
          %s1213 = sshllo.u32 0, 128
          loop: start=0, step=1, limit=1
          $region99: #{moco_forward.1} parent=97 // loop_pre_header
            _
          $region100: #{moco_forward.1} parent=97 // loop_header
            %s1215 = sphi 0, %s1219
            %p1216 = scmp.ge.s32.totalorder %s1215, 1
            %s1220 = sphi %s1200, %s1200
            %s1221 = sphi %s1203, %s1203
          $region101: #{moco_forward.1} parent=97 // loop_header_branch
            %1218 = sbr.rel (%p1216) target = $region105
          $region102: #{moco_forward.1} parent=97 // loop_body
            %v1222 = vld [vmem:[%s1220] sm:%s1213]
            %1223 = vst [vmem:[%s1221] sm:%s1213] %v1222
          $region103: #{moco_forward.1} parent=97 // loop_footer
            %s1219 = sadd.s32 1, %s1215
          $region104: #{moco_forward.1} parent=97 // loop_footer_branch
            %1214 = sbr.rel target = $region100
          $region105: #{moco_forward.1} parent=97 // loop_exit
            _
        $region98: #{moco_forward.1} parent=89 // pred_fallthru
          _
        // Predicated region
        $region121: #{moco_forward.1} parent=89 // pred_check
          _
        $region122: #{moco_forward.1} parent=89 // pred_check_branch
          %1275 = sbr.rel (0) target = $region124
        $region123: #{moco_forward.1} parent=89 // pred_region
          %1276 = vsyncadd %s1204, 2048
        $region124: #{moco_forward.1} parent=89 // pred_fallthru
          _
      $region90: #{moco_forward.1} parent=83 // pred_fallthru
        _
      %v1277 = vld [vmem:[%s1184] sm:$0xff]
      %v1278 = vld [vmem:[%s1184 + $0x8] sm:$0xff]
      %v1279 = vld [vmem:[%s1184 + $0x10] sm:$0xff]
      %v1280 = vld [vmem:[%s1184 + $0x18] sm:$0xff]
      %v1281 = vld [vmem:[%s1184 + $0x20] sm:$0xff]
      %v1282 = vld [vmem:[%s1184 + $0x28] sm:$0xff]
      %v1283 = vld [vmem:[%s1184 + $0x30] sm:$0xff]
      %v1284 = vld [vmem:[%s1184 + $0x38] sm:$0xff]
      %v1285 = vld [vmem:[%s1184 + $0x40] sm:$0xff]
      %v1286 = vld [vmem:[%s1184 + $0x48] sm:$0xff]
      %v1287 = vld [vmem:[%s1184 + $0x50] sm:$0xff]
      %v1288 = vld [vmem:[%s1184 + $0x58] sm:$0xff]
      %v1289 = vld [vmem:[%s1184 + $0x60] sm:$0xff]
      %v1290 = vld [vmem:[%s1184 + $0x68] sm:$0xff]
      %v1291 = vld [vmem:[%s1184 + $0x70] sm:$0xff]
      %v1292 = vld [vmem:[%s1184 + $0x78] sm:$0xff]
      %1293 = vmatprep.subr.bf16.mxu0 0
      %1294 = vmatpush1.bf16.xpose.msra.mxu0 %v1277
      %1295 = vmatprep.subr.bf16.mxu0 0
      %1296 = vmatpush1.bf16.xpose.msra.mxu0 %v1278
      %1297 = vmatprep.subr.bf16.mxu0 0
      %1298 = vmatpush1.bf16.xpose.msra.mxu0 %v1279
      %1299 = vmatprep.subr.bf16.mxu0 0
      %1300 = vmatpush1.bf16.xpose.msra.mxu0 %v1280
      %1301 = vmatprep.subr.bf16.mxu0 0
      %1302 = vmatpush1.bf16.xpose.msra.mxu0 %v1281
      %1303 = vmatprep.subr.bf16.mxu0 0
      %1304 = vmatpush1.bf16.xpose.msra.mxu0 %v1282
      %1305 = vmatprep.subr.bf16.mxu0 0
      %1306 = vmatpush1.bf16.xpose.msra.mxu0 %v1283
      %1307 = vmatprep.subr.bf16.mxu0 0
      %1308 = vmatpush1.bf16.xpose.msra.mxu0 %v1284
      %1309 = vmatprep.subr.bf16.mxu0 0
      %1310 = vmatpush1.bf16.xpose.msra.mxu0 %v1285
      %1311 = vmatprep.subr.bf16.mxu0 0
      %1312 = vmatpush1.bf16.xpose.msra.mxu0 %v1286
      %1313 = vmatprep.subr.bf16.mxu0 0
      %1314 = vmatpush1.bf16.xpose.msra.mxu0 %v1287
      %1315 = vmatprep.subr.bf16.mxu0 0
      %1316 = vmatpush1.bf16.xpose.msra.mxu0 %v1288
      %1317 = vmatprep.subr.bf16.mxu0 0
      %1318 = vmatpush1.bf16.xpose.msra.mxu0 %v1289
      %1319 = vmatprep.subr.bf16.mxu0 0
      %1320 = vmatpush1.bf16.xpose.msra.mxu0 %v1290
      %1321 = vmatprep.subr.bf16.mxu0 0
      %1322 = vmatpush1.bf16.xpose.msra.mxu0 %v1291
      %1323 = vmatprep.subr.bf16.mxu0 0
      %1324 = vmatpush1.bf16.xpose.msra.mxu0 %v1292
      %1325 = vmatprep.mubr.bf16.mxu0 0
      %1326 = vmatmul.mubr.bf16.gmra.mrb[0].mxu0 %v1163
      %v1327 = vpop.f32.mrb[0].mxu0
      %v1328 = vadd.f32 0.0, %v1327
      %v1329 = vpop.f32.mrb[0].mxu0
      %v1330 = vadd.f32 0.0, %v1329
      %v1331 = vpop.f32.mrb[0].mxu0
      %v1332 = vadd.f32 0.0, %v1331
      %v1333 = vpop.f32.mrb[0].mxu0
      %v1334 = vadd.f32 0.0, %v1333
      %1335 = vdwg.mxu0
      %v1336 = vld [vmem:[#allocation6] sm:$0xff]
      %v1337 = vld [vmem:[#allocation6 + $0x8] sm:$0xff]
      %v1338 = vmax.f32 %v1328, %v1330
      %1339 = vmax.xlane.f32.xlu0 %v1338
      %v1340 = vpop.xlane.xlu0 %1339
      %v1341 = vmax.f32 %v1332, %v1334
      %1342 = vmax.xlane.f32.xlu0 %v1341
      %v1343 = vpop.xlane.xlu0 %1342
      %v1344 = vmax.f32 %v1336, %v1340
      %v1345 = vmax.f32 %v1337, %v1343
      %v1346 = vld [vmem:[#allocation7] sm:$0xff]
      %v1347 = vld [vmem:[#allocation7 + $0x8] sm:$0xff]
      %v1348 = vsub.f32 %v1336, %v1344
      %v1349 = vsub.f32 %v1337, %v1345
      %v1350 = vmul.f32 %v1348, 1.442695
      %v1351 = vpow.pop %v1350
      %v1352 = vmul.f32 %v1349, 1.442695
      %v1353 = vpow.pop %v1352
      %v1354 = vmul.f32 %v1346, %v1351
      %v1355 = vmul.f32 %v1347, %v1353
      %1357 = vset.pattern.permute.xlu0 0
      %1358 = vperm.xlu0 %1357, %v1344
      %v1359 = vpop.permute.xlu0 %1358
      %1362 = vset.pattern.permute.xlu0 0
      %1363 = vperm.xlu0 %1362, %v1345
      %v1364 = vpop.permute.xlu0 %1363
      %v1366 = vsub.f32 %v1328, %v1359
      %v1367 = vsub.f32 %v1330, %v1359
      %v1368 = vsub.f32 %v1332, %v1364
      %v1369 = vsub.f32 %v1334, %v1364
      %v1370 = vmul.f32 %v1366, 1.442695
      %v1371 = vpow.pop %v1370
      %v1372 = vmul.f32 %v1367, 1.442695
      %v1373 = vpow.pop %v1372
      %v1374 = vmul.f32 %v1368, 1.442695
      %v1375 = vpow.pop %v1374
      %v1376 = vmul.f32 %v1369, 1.442695
      %v1377 = vpow.pop %v1376
      %v1378 = vadd.f32 %v1371, %v1373
      %1379 = vadd.xlane.f32.xlu0 %v1378
      %v1380 = vpop.xlane.xlu0 %1379
      %v1381 = vadd.f32 %v1375, %v1377
      %1382 = vadd.xlane.f32.xlu0 %v1381
      %v1383 = vpop.xlane.xlu0 %1382
      %v1384 = vadd.f32 %v1354, %v1380
      %v1385 = vadd.f32 %v1355, %v1383
      %1386 = vst.msk [vmem:[#allocation7] sm:$0xff] %vm1170, %v1384
      %1387 = vst.msk [vmem:[#allocation7 + $0x8] sm:$0xff] %vm1170, %v1385
      %1388 = vst.msk [vmem:[#allocation6] sm:$0xff] %vm1170, %v1344
      %1389 = vst.msk [vmem:[#allocation6 + $0x8] sm:$0xff] %vm1170, %v1345
    $region84: #{moco_forward.1} parent=1 // loop_footer
      %s1180 = sadd.s32 1, %s1176
    $region85: #{moco_forward.1} parent=1 // loop_footer_branch
      %1175 = sbr.rel target = $region81
    $region86: #{moco_forward.1} parent=1 // loop_exit
      _
    %v1390 = vld [vmem:[#allocation6] sm:$0xff]
    %v1391 = vld [vmem:[#allocation6 + $0x8] sm:$0xff]
    %v1392 = vld [vmem:[#allocation7] sm:$0xff]
    %v1393 = vld [vmem:[#allocation7 + $0x8] sm:$0xff]
    %v1394 = vlog2.pop %v1392
    %v1395 = vmul.f32 %v1394, 0.6931472
    %v1396 = vlog2.pop %v1393
    %v1397 = vmul.f32 %v1396, 0.6931472
    %v1398 = vadd.f32 %v1390, %v1395
    %v1399 = vadd.f32 %v1391, %v1397
    %v1400 = vsub.f32 %v1398, %v1167
    %v1401 = vsub.f32 %v1399, %v1169
    %v1402 = vsel %vm1170, %v1400, 0.0
    %v1403 = vsel %vm1170, %v1401, 0.0
    %v1404 = vadd.f32 %v1402, %v1403
    %1405 = vadd.xlane.f32.xlu0 %v1404
    %v1406 = vpop.xlane.xlu0 %1405
    %v1407 = vrot.slane %v1406, 4
    %v1408 = vadd.f32 %v1406, %v1407
    %v1409 = vrot.slane %v1408, 2
    %v1410 = vadd.f32 %v1408, %v1409
    %v1411 = vrot.slane %v1410, 1
    %v1412 = vadd.f32 %v1410, %v1411
    %s1413 = vtos %v1412
    %s1414 = smul.f32 %s1413, 0.125
    %v1415 = vstv %s1414
    %vm1416 = vcmask 0
    %1417 = vst.msk [vmem:[#allocation9] sm:$0x1] %vm1416, %v1415
    %v1418 = vpack.c.bf16 %v1160, %v1159
    %1419 = vst [vmem:[#allocation4] sm:$0xff] %v1418
    %s1420 = sshra.s32 %s48, 3
    %s1421 = sand.u32 %s48, 7
    %s1422 = smul.addr %s1420, 4
    %s1423 = scalar_lea.vmem %s17, %s1422
    %p1425 = scmp.lt.u32.totalorder 8, 8
    %p1426 = pneg %p1425
    // Predicated region
    $region125: #{moco_forward.1} parent=1 // pred_check
      _
    $region126: #{moco_forward.1} parent=1 // pred_check_branch
      %1428 = sbr.rel (%p1425) target = $region128
    $region127: #{moco_forward.1} parent=1 // pred_region
      %s1443 = sand.u32 8, 7
      %p1444 = scmp.eq.s32.totalorder %s1443, 0
      // Predicated region
      $region140: #{moco_forward.1} parent=127 // pred_check
        %p1445 = pneg %p1444
      $region141: #{moco_forward.1} parent=127 // pred_check_branch
        %1447 = sbr.rel (%p1445) target = $region143
      $region142: #{moco_forward.1} parent=127 // pred_region
        loop: start=0, step=1, limit=1
        $region144: #{moco_forward.1} parent=142 // loop_pre_header
          _
        $region145: #{moco_forward.1} parent=142 // loop_header
          %s1449 = sphi 0, %s1453
          %p1450 = scmp.ge.s32.totalorder %s1449, 1
          %s1454 = sphi [#allocation4], [#allocation4]
          %s1455 = sphi %s1423, %s1423
        $region146: #{moco_forward.1} parent=142 // loop_header_branch
          %1452 = sbr.rel (%p1450) target = $region150
        $region147: #{moco_forward.1} parent=142 // loop_body
          %v1456 = vld [vmem:[%s1454] sm:$0xff]
          %1457 = vst [vmem:[%s1455] sm:$0xff] %v1456
        $region148: #{moco_forward.1} parent=142 // loop_footer
          %s1453 = sadd.s32 1, %s1449
        $region149: #{moco_forward.1} parent=142 // loop_footer_branch
          %1448 = sbr.rel target = $region145
        $region150: #{moco_forward.1} parent=142 // loop_exit
          _
      $region143: #{moco_forward.1} parent=127 // pred_fallthru
        _
      %p1458 = pneg %p1444
      // Predicated region
      $region151: #{moco_forward.1} parent=127 // pred_check
        _
      $region152: #{moco_forward.1} parent=127 // pred_check_branch
        %1460 = sbr.rel (%p1444) target = $region154
      $region153: #{moco_forward.1} parent=127 // pred_region
        %s1461 = sand.u32 8, 7
      $region154: #{moco_forward.1} parent=127 // pred_fallthru
        _
    $region128: #{moco_forward.1} parent=1 // pred_fallthru
      _
    // Predicated region
    $region129: #{moco_forward.1} parent=1 // pred_check
      %p1429 = pneg %p1425
    $region130: #{moco_forward.1} parent=1 // pred_check_branch
      %1431 = sbr.rel (%p1429) target = $region132
    $region131: #{moco_forward.1} parent=1 // pred_region
      %s1432 = sshllo.u32 0, 8
      loop: start=0, step=1, limit=1
      $region133: #{moco_forward.1} parent=131 // loop_pre_header
        _
      $region134: #{moco_forward.1} parent=131 // loop_header
        %s1434 = sphi 0, %s1438
        %p1435 = scmp.ge.s32.totalorder %s1434, 1
        %s1439 = sphi [#allocation4], [#allocation4]
        %s1440 = sphi %s1423, %s1423
      $region135: #{moco_forward.1} parent=131 // loop_header_branch
        %1437 = sbr.rel (%p1435) target = $region139
      $region136: #{moco_forward.1} parent=131 // loop_body
        %v1441 = vld [vmem:[%s1439] sm:%s1432]
        %1442 = vst [vmem:[%s1440] sm:%s1432] %v1441
      $region137: #{moco_forward.1} parent=131 // loop_footer
        %s1438 = sadd.s32 1, %s1434
      $region138: #{moco_forward.1} parent=131 // loop_footer_branch
        %1433 = sbr.rel target = $region134
      $region139: #{moco_forward.1} parent=131 // loop_exit
        _
    $region132: #{moco_forward.1} parent=1 // pred_fallthru
      _
    // Predicated region
    $region155: #{moco_forward.1} parent=1 // pred_check
      _
    $region156: #{moco_forward.1} parent=1 // pred_check_branch
      %1464 = sbr.rel (0) target = $region158
    $region157: #{moco_forward.1} parent=1 // pred_region
      %1465 = vsyncadd [#allocation5], 128
    $region158: #{moco_forward.1} parent=1 // pred_fallthru
      _
    %s1466 = smul.u32 4, 2
    %s1467 = smul.u32 %s1466, 1
    %s1468 = sshll.u32 %s1467, 4
    %1469 = dma.done [#allocation5], %s1468
    // Predicated region
    $region159: #{moco_forward.1} parent=1 // pred_check
      _
    $region160: #{moco_forward.1} parent=1 // pred_check_branch
      %1471 = sbr.rel (0) target = $region162
    $region161: #{moco_forward.1} parent=1 // pred_region
      %s1473 = ssub.s32 16, 16
      %1474 = vsyncadd [#allocation10], %s1473
      %s1476 = sshll.u32 [#allocation9], 4
      %s1477 = int_to_ptr.vmem [resolvable:$true] %s1476
      %1479 = dma.vmem_to_hbm [thread:$0]  %s1477, 16, %s12, [#allocation10]
    $region162: #{moco_forward.1} parent=1 // pred_fallthru
      _
    // Predicated region
    $region163: #{moco_forward.1} parent=1 // pred_check
      _
    $region164: #{moco_forward.1} parent=1 // pred_check_branch
      %1481 = sbr.rel (0) target = $region166
    $region165: #{moco_forward.1} parent=1 // pred_region
      _
    $region166: #{moco_forward.1} parent=1 // pred_fallthru
      _
    // Predicated region
    $region167: #{moco_forward.1} parent=1 // pred_check
      _
    $region168: #{moco_forward.1} parent=1 // pred_check_branch
      %1483 = sbr.rel (0) target = $region170
    $region169: #{moco_forward.1} parent=1 // pred_region
      _
    $region170: #{moco_forward.1} parent=1 // pred_fallthru
      _
    // Predicated region
    $region171: #{moco_forward.1} parent=1 // pred_check
      _
    $region172: #{moco_forward.1} parent=1 // pred_check_branch
      %1485 = sbr.rel (0) target = $region174
    $region173: #{moco_forward.1} parent=1 // pred_region
      _
    $region174: #{moco_forward.1} parent=1 // pred_fallthru
      _
    // Predicated region
    $region175: #{moco_forward.1} parent=1 // pred_check
      _
    $region176: #{moco_forward.1} parent=1 // pred_check_branch
      %1487 = sbr.rel (0) target = $region178
    $region177: #{moco_forward.1} parent=1 // pred_region
      _
    $region178: #{moco_forward.1} parent=1 // pred_fallthru
      _
    // Predicated region
    $region179: #{moco_forward.1} parent=1 // pred_check
      _
    $region180: #{moco_forward.1} parent=1 // pred_check_branch
      %1489 = sbr.rel (0) target = $region182
    $region181: #{moco_forward.1} parent=1 // pred_region
      %1490 = dma.done [#allocation10], 16
    $region182: #{moco_forward.1} parent=1 // pred_fallthru
      _
    // Predicated region
    $region183: #{moco_forward.1} parent=1 // pred_check
      _
    $region184: #{moco_forward.1} parent=1 // pred_check_branch
      %1492 = sbr.rel (0) target = $region186
    $region185: #{moco_forward.1} parent=1 // pred_region
      _
    $region186: #{moco_forward.1} parent=1 // pred_fallthru
      _
    // Predicated region
    $region187: #{moco_forward.1} parent=1 // pred_check
      _
    $region188: #{moco_forward.1} parent=1 // pred_check_branch
      %1494 = sbr.rel (0) target = $region190
    $region189: #{moco_forward.1} parent=1 // pred_region
      _
    $region190: #{moco_forward.1} parent=1 // pred_fallthru
      _
    // Predicated region
    $region191: #{moco_forward.1} parent=1 // pred_check
      _
    $region192: #{moco_forward.1} parent=1 // pred_check_branch
      %1496 = sbr.rel (0) target = $region194
    $region193: #{moco_forward.1} parent=1 // pred_region
      _
    $region194: #{moco_forward.1} parent=1 // pred_fallthru
      _
    // Predicated region
    $region195: #{moco_forward.1} parent=1 // pred_check
      _
    $region196: #{moco_forward.1} parent=1 // pred_check_branch
      %1498 = sbr.rel (0) target = $region198
    $region197: #{moco_forward.1} parent=1 // pred_region
      _
    $region198: #{moco_forward.1} parent=1 // pred_fallthru
      _
    %1499 = vsyncpa [#allocation10], 1
  %1500 = vsyncmov [#allocation3]
  %s1501 = vpop.sfrf %1500
  %p1502 = scmp.eq.s32.totalorder %s1501, 0
  %p1503 = pneg %p1502
  %1505 = shalt.err (%p1503)
  %s1506 = scalar_lea.sflag [#allocation3], 1
  %1507 = vsyncmov %s1506
  %s1508 = vpop.sfrf %1507
  %p1509 = scmp.eq.s32.totalorder %s1508, 0
  %p1510 = pneg %p1509
  %1512 = shalt.err (%p1510)
  %1513 = vsyncmov [#allocation5]
  %s1514 = vpop.sfrf %1513
  %p1515 = scmp.eq.s32.totalorder %s1514, 0
  %p1516 = pneg %p1515
  %1518 = shalt.err (%p1516)

</llo_original>
